<compile_context>
chip_gen: v5e
topology: v5e:2x2
jax: 0.10.0
libtpu: 0.0.40
codegen_flags: <defaults>
</compile_context>

<pallas_src>
import math

import jax
import jax.numpy as jnp
from jax import lax
from jax.experimental import pallas as pl
from jax.experimental.pallas import tpu as pltpu

# ---------------- config (small synthetic shapes) ----------------
B, C, T = 2, 8, 64          # batch, EEG electrodes, time samples
KT, F = 9, 16               # temporal conv kernel, conv filters
T1 = T - KT + 1             # 56 time steps after temporal conv
P = 7                       # avg-pool window / stride
L = T1 // P                 # 8 tokens
D = 32                      # d_model
NH, DH = 4, 8               # heads, head dim
DFF = 64                    # FFN hidden
NLAYERS = 2
CLSH = 64                   # cls head hidden
NLABELS = 4
CLS_LOSS_SCALE = 1.0
BL = B * L                  # 16 rows carried through the encoder (token-major)
SLAB_W = 128                # packed-weight slab lane width


# ---------------- packed-weight slab layout (static, shared by host & kernel) ----------------
def _build_layout():
    layout = {}
    off = 0

    def add(name, rows, cols):
        nonlocal off
        layout[name] = (off, rows, cols)
        off += rows

    add("poolbd", BL, B * T1)          # block-diag avg-pool matrix
    add("mask", NH * BL, NH * BL)      # head x batch additive attention mask
    add("pe", BL, D)                   # sincos time embedding (token-major rows)
    add("wf", C * KT, F)               # fused temporal+spatial conv weight
    add("bf", 1, F)
    add("wp", F, D)                    # 1x1 projection
    add("bp", 1, D)
    for l in range(NLAYERS):
        add(f"ln1g_{l}", 1, D)
        add(f"ln1b_{l}", 1, D)
        add(f"wqkv_{l}", D, 3 * D)     # fused QKV weight
        add(f"bqkv_{l}", 1, 3 * D)
        add(f"wo_{l}", D, D)
        add(f"bo_{l}", 1, D)
        add(f"ln2g_{l}", 1, D)
        add(f"ln2b_{l}", 1, D)
        add(f"w1_{l}", D, DFF)
        add(f"b1_{l}", 1, DFF)
        add(f"w2_{l}", DFF, D)
        add(f"b2_{l}", 1, D)
    add("cw1", L * D, CLSH)            # cls flatten weight (row index = l*D + d)
    add("cb1", 1, CLSH)
    add("cw2", CLSH, NLABELS)
    add("cb2", 1, NLABELS)
    return layout, off


WLAYOUT, WROWS = _build_layout()
WROWS_P = ((WROWS + 7) // 8) * 8       # pad rows to a sublane multiple


# ---------------- in-kernel helpers (traced) ----------------
def _elu(x):
    return jnp.where(x > 0, x, jnp.exp(x) - 1.0)


def _layernorm(x, g, b, eps=1e-5):
    mu = jnp.mean(x, axis=-1, keepdims=True)
    xc = x - mu
    var = jnp.mean(xc * xc, axis=-1, keepdims=True)
    return xc * lax.rsqrt(var + eps) * g + b


# ---------------- fully fused forward kernel ----------------
def fused_forward_kernel(xcol_ref, y_ref, w_ref, ypred_ref, loss_ref):
    def wget(name):
        off, rows, cols = WLAYOUT[name]
        return w_ref[off:off + rows, 0:cols]      # static slice of the weight slab

    # --- ConvTokenizer: fused temporal+spatial conv (single matmul), ELU,
    #     avg-pool as block-diag matmul, 1x1 projection, + sincos TimeEmbedding.
    # TODO(synk): BatchNorm2d folded as identity (eval mode, unit running stats).
    hconv = _elu(jnp.dot(xcol_ref[...], wget("wf"),
                         preferred_element_type=jnp.float32) + wget("bf"))        # (B*T1, F)
    pooled = jnp.dot(wget("poolbd"), hconv, preferred_element_type=jnp.float32)   # (BL, F)
    x = (jnp.dot(pooled, wget("wp"), preferred_element_type=jnp.float32)
         + wget("bp") + wget("pe"))                                               # (BL, D)

    mask = wget("mask")                 # 0 within same head & batch, -1e9 elsewhere
    scale = 1.0 / math.sqrt(DH)

    # --- TransformerStack: NLAYERS pre-LN encoder layers, statically unrolled.
    # TODO(synk): TransformerStack assumed pre-LN with GELU FFN (custom module
    # not shown in the spec); adjust if it follows post-LN / ReLU defaults.
    for l in range(NLAYERS):
        hn = _layernorm(x, wget(f"ln1g_{l}"), wget(f"ln1b_{l}"))
        qkv = (jnp.dot(hn, wget(f"wqkv_{l}"), preferred_element_type=jnp.float32)
               + wget(f"bqkv_{l}"))                                               # (BL, 3D)
        q, k, v = qkv[:, 0:D], qkv[:, D:2 * D], qkv[:, 2 * D:3 * D]
        # stack heads along sublanes -> (NH*BL, DH); one softmax for all heads
        qs = jnp.concatenate([q[:, h * DH:(h + 1) * DH] for h in range(NH)], axis=0)
        ks = jnp.concatenate([k[:, h * DH:(h + 1) * DH] for h in range(NH)], axis=0)
        vs = jnp.concatenate([v[:, h * DH:(h + 1) * DH] for h in range(NH)], axis=0)
        s = (lax.dot_general(qs, ks, (((1,), (1,)), ((), ())),
                             preferred_element_type=jnp.float32) * scale + mask)  # (64, 64)
        s = s - jnp.max(s, axis=-1, keepdims=True)
        p = jnp.exp(s)
        p = p * pl.reciprocal(jnp.sum(p, axis=-1, keepdims=True), approx=True)
        o_s = jnp.dot(p, vs, preferred_element_type=jnp.float32)                  # (NH*BL, DH)
        # lane-concat head outputs, then ONE full output projection
        o = jnp.concatenate([o_s[h * BL:(h + 1) * BL, :] for h in range(NH)], axis=1)
        x = (x + jnp.dot(o, wget(f"wo_{l}"), preferred_element_type=jnp.float32)
             + wget(f"bo_{l}"))
        hn2 = _layernorm(x, wget(f"ln2g_{l}"), wget(f"ln2b_{l}"))
        ffn = jax.nn.gelu(jnp.dot(hn2, wget(f"w1_{l}"), preferred_element_type=jnp.float32)
                          + wget(f"b1_{l}"), approximate=True)
        x = (x + jnp.dot(ffn, wget(f"w2_{l}"), preferred_element_type=jnp.float32)
             + wget(f"b2_{l}"))

    # --- LambdaLayer keeps hidden states; LabelCLSHead: flatten token-major rows
    #     (l*B + b) into a (B, L*D) lane-dense slab -> one matmul, ELU, one matmul.
    xflat = jnp.concatenate([x[l * B:(l + 1) * B, :] for l in range(L)], axis=1)  # (B, L*D)
    hcls = _elu(jnp.dot(xflat, wget("cw1"), preferred_element_type=jnp.float32)
                + wget("cb1"))
    logits = (jnp.dot(hcls, wget("cw2"), preferred_element_type=jnp.float32)
              + wget("cb2"))
    ypred_ref[...] = logits

    # --- cross-entropy with probability targets, mean over batch.
    m = jnp.max(logits, axis=-1, keepdims=True)
    z = logits - m
    lse = jnp.log(jnp.sum(jnp.exp(z), axis=-1, keepdims=True))
    logp = z - lse
    per_ex = -jnp.sum(y_ref[...] * logp, axis=-1, keepdims=True)                  # (B, 1)
    loss_ref[...] = jnp.sum(per_ex, axis=0, keepdims=True) * (1.0 / B)


# ---------------- host-side glue ----------------
def im2col_fused(X):
    """(B, C, T) -> (B*T1, C*KT): row b*T1+t, col c*KT+kt = X[b, c, t+kt]."""
    idx = jnp.arange(T1)[:, None] + jnp.arange(KT)[None, :]                 # (T1, KT)
    cols = X[:, :, idx]                                                     # (B, C, T1, KT)
    cols = jnp.transpose(cols, (0, 2, 1, 3))                                # (B, T1, C, KT)
    return cols.reshape(B * T1, C * KT)


def sincos_pe(length, dim):
    pos = jnp.arange(length, dtype=jnp.float32)[:, None]
    i = jnp.arange(dim // 2, dtype=jnp.float32)[None, :]
    angle = pos / jnp.power(10000.0, 2.0 * i / dim)
    pe = jnp.zeros((length, dim), jnp.float32)
    pe = pe.at[:, 0::2].set(jnp.sin(angle))
    pe = pe.at[:, 1::2].set(jnp.cos(angle))
    return pe


def pooling_blockdiag():
    """(BL, B*T1) average-pool matrix; output rows are token-major (l*B + b)."""
    r = jnp.arange(BL)
    rl, rb = r // B, r % B
    c = jnp.arange(B * T1)
    cb, ct = c // T1, c % T1
    same_b = rb[:, None] == cb[None, :]
    in_win = (ct[None, :] >= rl[:, None] * P) & (ct[None, :] < (rl[:, None] + 1) * P)
    return jnp.where(same_b & in_win, 1.0 / P, 0.0).astype(jnp.float32)


def attention_mask_stacked():
    """(NH*BL, NH*BL) additive mask for head-stacked rows (h*BL + l*B + b):
    0 if same head AND same batch element, -1e9 otherwise."""
    r = jnp.arange(NH * BL)
    head = r // BL
    batch = (r % BL) % B
    same = (head[:, None] == head[None, :]) & (batch[:, None] == batch[None, :])
    return jnp.where(same, 0.0, -1e9).astype(jnp.float32)


def pack_slab(arrays):
    """Pack all weights / constants into one (WROWS_P, SLAB_W) f32 slab (init-time only)."""
    slab = jnp.zeros((WROWS_P, SLAB_W), jnp.float32)
    for name, (off, rows, cols) in WLAYOUT.items():
        a = jnp.asarray(arrays[name], jnp.float32).reshape(rows, cols)
        slab = slab.at[off:off + rows, 0:cols].set(a)
    return slab


def dewave_forward(params, X, y_true):
    """Per-call path: im2col + ONE fused pallas_call (3 input DMAs total)."""
    xcol = im2col_fused(X)                                                  # (B*T1, C*KT)
    vmem = pl.BlockSpec(memory_space=pltpu.MemorySpace.VMEM)
    y_pred, loss = pl.pallas_call(
        fused_forward_kernel,
        out_shape=(jax.ShapeDtypeStruct((B, NLABELS), jnp.float32),
                   jax.ShapeDtypeStruct((1, 1), jnp.float32)),
        in_specs=[vmem, vmem, vmem],
        out_specs=(vmem, vmem),
        cost_estimate=pl.CostEstimate(flops=1_200_000, transcendentals=8_000,
                                      bytes_accessed=500_000),
    )(xcol, y_true, params["wslab"])
    loss_cls = loss[0, 0]
    return y_pred, {"total": CLS_LOSS_SCALE * loss_cls, "cls": loss_cls}


def init_params(key):
    """All weight folding / fusing / packing happens ONCE here (hoisted out of forward)."""
    keys = iter(jax.random.split(key, 64))

    def nrm(shape, scale=0.02):
        return scale * jax.random.normal(next(keys), shape, jnp.float32)

    # tokenizer natural params
    w1 = nrm((KT, F))
    b1 = jnp.zeros((1, F), jnp.float32)
    w2t = nrm((C, F, F))
    b2 = jnp.zeros((1, F), jnp.float32)
    wp = nrm((F, D))
    bp = jnp.zeros((1, D), jnp.float32)
    # fold temporal conv + spatial conv (both linear, BN=identity) into one matmul
    wf = jnp.einsum("kf,cfg->ckg", w1, w2t).reshape(C * KT, F)
    bf = jnp.dot(b1, jnp.sum(w2t, axis=0)) + b2

    arrays = {
        "poolbd": pooling_blockdiag(),
        "mask": attention_mask_stacked(),
        "pe": jnp.repeat(sincos_pe(L, D), B, axis=0),   # token-major rows l*B + b
        "wf": wf, "bf": bf, "wp": wp, "bp": bp,
    }
    for l in range(NLAYERS):
        wq, wk, wv = nrm((D, D)), nrm((D, D)), nrm((D, D))
        arrays[f"ln1g_{l}"] = jnp.ones((1, D), jnp.float32)
        arrays[f"ln1b_{l}"] = jnp.zeros((1, D), jnp.float32)
        arrays[f"wqkv_{l}"] = jnp.concatenate([wq, wk, wv], axis=1)
        arrays[f"bqkv_{l}"] = jnp.zeros((1, 3 * D), jnp.float32)
        arrays[f"wo_{l}"] = nrm((D, D))
        arrays[f"bo_{l}"] = jnp.zeros((1, D), jnp.float32)
        arrays[f"ln2g_{l}"] = jnp.ones((1, D), jnp.float32)
        arrays[f"ln2b_{l}"] = jnp.zeros((1, D), jnp.float32)
        arrays[f"w1_{l}"] = nrm((D, DFF))
        arrays[f"b1_{l}"] = jnp.zeros((1, DFF), jnp.float32)
        arrays[f"w2_{l}"] = nrm((DFF, D))
        arrays[f"b2_{l}"] = jnp.zeros((1, D), jnp.float32)
    arrays["cw1"] = nrm((L * D, CLSH))
    arrays["cb1"] = jnp.zeros((1, CLSH), jnp.float32)
    arrays["cw2"] = nrm((CLSH, NLABELS))
    arrays["cb2"] = jnp.zeros((1, NLABELS), jnp.float32)

    return {"wslab": pack_slab(arrays)}


if __name__ == "__main__":
    key = jax.random.PRNGKey(0)
    kx, kp = jax.random.split(key)
    X = jax.random.normal(kx, (B, C, T), jnp.float32)
    labels = jnp.array([1, 3], dtype=jnp.int32)
    y_true = jax.nn.one_hot(labels, NLABELS, dtype=jnp.float32)
    params = init_params(kp)

    y_pred, loss = jax.jit(dewave_forward)(params, X, y_true)
    jax.block_until_ready((y_pred, loss["total"], loss["cls"]))
    assert y_pred.shape == (B, NLABELS)
    print("KERNEL_OK")
</pallas_src>

<mosaic_0001>
module attributes {stable_mosaic.version = 11 : i64} {
  func.func @fused_forward_kernel(%arg0: memref<112x72xf32, #tpu.memory_space<vmem>>, %arg1: memref<2x4xf32, #tpu.memory_space<vmem>>, %arg2: memref<848x128xf32, #tpu.memory_space<vmem>>, %arg3: memref<2x4xf32, #tpu.memory_space<vmem>>, %arg4: memref<1x1xf32, #tpu.memory_space<vmem>>) attributes {dimension_semantics = [], scalar_prefetch = 0 : i64, scratch_operands = 0 : i64, tpu.core_type = #tpu.core_type<tc>} {
    %c0 = arith.constant 0 : index
    %c0_0 = arith.constant 0 : index
    %0 = vector.load %arg0[%c0, %c0_0] : memref<112x72xf32, #tpu.memory_space<vmem>>, vector<112x72xf32>
    %c96 = arith.constant 96 : index
    %c0_1 = arith.constant 0 : index
    %1 = vector.load %arg2[%c96, %c0_1] : memref<848x128xf32, #tpu.memory_space<vmem>>, vector<72x16xf32>
    %cst = arith.constant dense<0.000000e+00> : vector<112x16xf32>
    %2 = tpu.matmul %0, %1, %cst {dimension_numbers = #tpu.dot_dimension_numbers<[1], [0], [0], [1], [0, 0, 1, 1], [], []>} : vector<112x72xf32>, vector<72x16xf32>, vector<112x16xf32> -> vector<112x16xf32>
    %c168 = arith.constant 168 : index
    %c0_2 = arith.constant 0 : index
    %3 = vector.load %arg2[%c168, %c0_2] : memref<848x128xf32, #tpu.memory_space<vmem>>, vector<1x16xf32>
    %4 = vector.broadcast %3 : vector<1x16xf32> to vector<112x16xf32>
    %5 = arith.addf %2, %4 : vector<112x16xf32>
    %cst_3 = arith.constant 0.000000e+00 : f32
    %6 = vector.broadcast %cst_3 : f32 to vector<112x16xf32>
    %7 = arith.cmpf ogt, %5, %6 : vector<112x16xf32>
    %8 = math.exp %5 : vector<112x16xf32>
    %cst_4 = arith.constant 1.000000e+00 : f32
    %9 = vector.broadcast %cst_4 : f32 to vector<112x16xf32>
    %10 = arith.subf %8, %9 : vector<112x16xf32>
    %11 = arith.select %7, %5, %10 : vector<112x16xi1>, vector<112x16xf32>
    %c0_5 = arith.constant 0 : index
    %c0_6 = arith.constant 0 : index
    %12 = vector.load %arg2[%c0_5, %c0_6] : memref<848x128xf32, #tpu.memory_space<vmem>>, vector<16x112xf32>
    %cst_7 = arith.constant dense<0.000000e+00> : vector<16x16xf32>
    %13 = tpu.matmul %12, %11, %cst_7 {dimension_numbers = #tpu.dot_dimension_numbers<[1], [0], [0], [1], [0, 0, 1, 1], [], []>} : vector<16x112xf32>, vector<112x16xf32>, vector<16x16xf32> -> vector<16x16xf32>
    %c169 = arith.constant 169 : index
    %c0_8 = arith.constant 0 : index
    %14 = vector.load %arg2[%c169, %c0_8] : memref<848x128xf32, #tpu.memory_space<vmem>>, vector<16x32xf32>
    %cst_9 = arith.constant dense<0.000000e+00> : vector<16x32xf32>
    %15 = tpu.matmul %13, %14, %cst_9 {dimension_numbers = #tpu.dot_dimension_numbers<[1], [0], [0], [1], [0, 0, 1, 1], [], []>} : vector<16x16xf32>, vector<16x32xf32>, vector<16x32xf32> -> vector<16x32xf32>
    %c185 = arith.constant 185 : index
    %c0_10 = arith.constant 0 : index
    %16 = vector.load %arg2[%c185, %c0_10] : memref<848x128xf32, #tpu.memory_space<vmem>>, vector<1x32xf32>
    %17 = vector.broadcast %16 : vector<1x32xf32> to vector<16x32xf32>
    %18 = arith.addf %15, %17 : vector<16x32xf32>
    %c80 = arith.constant 80 : index
    %c0_11 = arith.constant 0 : index
    %19 = vector.load %arg2[%c80, %c0_11] : memref<848x128xf32, #tpu.memory_space<vmem>>, vector<16x32xf32>
    %20 = arith.addf %18, %19 : vector<16x32xf32>
    %c16 = arith.constant 16 : index
    %c0_12 = arith.constant 0 : index
    %21 = vector.load %arg2[%c16, %c0_12] : memref<848x128xf32, #tpu.memory_space<vmem>>, vector<64x64xf32>
    %c186 = arith.constant 186 : index
    %c0_13 = arith.constant 0 : index
    %22 = vector.load %arg2[%c186, %c0_13] : memref<848x128xf32, #tpu.memory_space<vmem>>, vector<1x32xf32>
    %c187 = arith.constant 187 : index
    %c0_14 = arith.constant 0 : index
    %23 = vector.load %arg2[%c187, %c0_14] : memref<848x128xf32, #tpu.memory_space<vmem>>, vector<1x32xf32>
    %cst_15 = arith.constant dense<0.000000e+00> : vector<16xf32>
    %24 = vector.multi_reduction <add>, %20, %cst_15 [1] : vector<16x32xf32> to vector<16xf32>
    %25 = vector.shape_cast %24 : vector<16xf32> to vector<16x1xf32>
    %cst_16 = arith.constant 3.200000e+01 : f32
    %26 = vector.broadcast %cst_16 : f32 to vector<16x1xf32>
    %27 = arith.divf %25, %26 : vector<16x1xf32>
    %28 = vector.broadcast %27 : vector<16x1xf32> to vector<16x32xf32>
    %29 = arith.subf %20, %28 : vector<16x32xf32>
    %30 = arith.mulf %29, %29 : vector<16x32xf32>
    %cst_17 = arith.constant dense<0.000000e+00> : vector<16xf32>
    %31 = vector.multi_reduction <add>, %30, %cst_17 [1] : vector<16x32xf32> to vector<16xf32>
    %32 = vector.shape_cast %31 : vector<16xf32> to vector<16x1xf32>
    %cst_18 = arith.constant 3.200000e+01 : f32
    %33 = vector.broadcast %cst_18 : f32 to vector<16x1xf32>
    %34 = arith.divf %32, %33 : vector<16x1xf32>
    %cst_19 = arith.constant 9.99999974E-6 : f32
    %35 = vector.broadcast %cst_19 : f32 to vector<16x1xf32>
    %36 = arith.addf %34, %35 : vector<16x1xf32>
    %37 = math.rsqrt %36 : vector<16x1xf32>
    %38 = vector.broadcast %37 : vector<16x1xf32> to vector<16x32xf32>
    %39 = arith.mulf %29, %38 : vector<16x32xf32>
    %40 = vector.broadcast %22 : vector<1x32xf32> to vector<16x32xf32>
    %41 = arith.mulf %39, %40 : vector<16x32xf32>
    %42 = vector.broadcast %23 : vector<1x32xf32> to vector<16x32xf32>
    %43 = arith.addf %41, %42 : vector<16x32xf32>
    %c188 = arith.constant 188 : index
    %c0_20 = arith.constant 0 : index
    %44 = vector.load %arg2[%c188, %c0_20] : memref<848x128xf32, #tpu.memory_space<vmem>>, vector<32x96xf32>
    %cst_21 = arith.constant dense<0.000000e+00> : vector<16x96xf32>
    %45 = tpu.matmul %43, %44, %cst_21 {dimension_numbers = #tpu.dot_dimension_numbers<[1], [0], [0], [1], [0, 0, 1, 1], [], []>} : vector<16x32xf32>, vector<32x96xf32>, vector<16x96xf32> -> vector<16x96xf32>
    %c220 = arith.constant 220 : index
    %c0_22 = arith.constant 0 : index
    %46 = vector.load %arg2[%c220, %c0_22] : memref<848x128xf32, #tpu.memory_space<vmem>>, vector<1x96xf32>
    %47 = vector.broadcast %46 : vector<1x96xf32> to vector<16x96xf32>
    %48 = arith.addf %45, %47 : vector<16x96xf32>
    %49 = vector.extract_strided_slice %48 {offsets = [0, 0], sizes = [16, 32], strides = [1, 1]} : vector<16x96xf32> to vector<16x32xf32>
    %50 = vector.extract_strided_slice %48 {offsets = [0, 32], sizes = [16, 32], strides = [1, 1]} : vector<16x96xf32> to vector<16x32xf32>
    %51 = vector.extract_strided_slice %48 {offsets = [0, 64], sizes = [16, 32], strides = [1, 1]} : vector<16x96xf32> to vector<16x32xf32>
    %52 = vector.extract_strided_slice %49 {offsets = [0, 0], sizes = [16, 8], strides = [1, 1]} : vector<16x32xf32> to vector<16x8xf32>
    %53 = vector.extract_strided_slice %49 {offsets = [0, 8], sizes = [16, 8], strides = [1, 1]} : vector<16x32xf32> to vector<16x8xf32>
    %54 = vector.extract_strided_slice %49 {offsets = [0, 16], sizes = [16, 8], strides = [1, 1]} : vector<16x32xf32> to vector<16x8xf32>
    %55 = vector.extract_strided_slice %49 {offsets = [0, 24], sizes = [16, 8], strides = [1, 1]} : vector<16x32xf32> to vector<16x8xf32>
    %56 = tpu.concatenate %52, %53, %54, %55 in 0 : vector<16x8xf32>, vector<16x8xf32>, vector<16x8xf32>, vector<16x8xf32> -> vector<64x8xf32>
    %57 = vector.extract_strided_slice %50 {offsets = [0, 0], sizes = [16, 8], strides = [1, 1]} : vector<16x32xf32> to vector<16x8xf32>
    %58 = vector.extract_strided_slice %50 {offsets = [0, 8], sizes = [16, 8], strides = [1, 1]} : vector<16x32xf32> to vector<16x8xf32>
    %59 = vector.extract_strided_slice %50 {offsets = [0, 16], sizes = [16, 8], strides = [1, 1]} : vector<16x32xf32> to vector<16x8xf32>
    %60 = vector.extract_strided_slice %50 {offsets = [0, 24], sizes = [16, 8], strides = [1, 1]} : vector<16x32xf32> to vector<16x8xf32>
    %61 = tpu.concatenate %57, %58, %59, %60 in 0 : vector<16x8xf32>, vector<16x8xf32>, vector<16x8xf32>, vector<16x8xf32> -> vector<64x8xf32>
    %62 = vector.extract_strided_slice %51 {offsets = [0, 0], sizes = [16, 8], strides = [1, 1]} : vector<16x32xf32> to vector<16x8xf32>
    %63 = vector.extract_strided_slice %51 {offsets = [0, 8], sizes = [16, 8], strides = [1, 1]} : vector<16x32xf32> to vector<16x8xf32>
    %64 = vector.extract_strided_slice %51 {offsets = [0, 16], sizes = [16, 8], strides = [1, 1]} : vector<16x32xf32> to vector<16x8xf32>
    %65 = vector.extract_strided_slice %51 {offsets = [0, 24], sizes = [16, 8], strides = [1, 1]} : vector<16x32xf32> to vector<16x8xf32>
    %66 = tpu.concatenate %62, %63, %64, %65 in 0 : vector<16x8xf32>, vector<16x8xf32>, vector<16x8xf32>, vector<16x8xf32> -> vector<64x8xf32>
    %cst_23 = arith.constant dense<0.000000e+00> : vector<64x64xf32>
    %67 = tpu.matmul %56, %61, %cst_23 {dimension_numbers = #tpu.dot_dimension_numbers<[1], [1], [0], [0], [0, 0, 1, 0], [], []>} : vector<64x8xf32>, vector<64x8xf32>, vector<64x64xf32> -> vector<64x64xf32>
    %cst_24 = arith.constant 0.353553385 : f32
    %68 = vector.broadcast %cst_24 : f32 to vector<64x64xf32>
    %69 = arith.mulf %67, %68 : vector<64x64xf32>
    %70 = arith.addf %69, %21 : vector<64x64xf32>
    %cst_25 = arith.constant dense<0xFF800000> : vector<64xf32>
    %71 = vector.multi_reduction <maximumf>, %70, %cst_25 [1] : vector<64x64xf32> to vector<64xf32>
    %72 = vector.shape_cast %71 : vector<64xf32> to vector<64x1xf32>
    %73 = vector.broadcast %72 : vector<64x1xf32> to vector<64x64xf32>
    %74 = arith.subf %70, %73 : vector<64x64xf32>
    %75 = math.exp %74 : vector<64x64xf32>
    %cst_26 = arith.constant dense<0.000000e+00> : vector<64xf32>
    %76 = vector.multi_reduction <add>, %75, %cst_26 [1] : vector<64x64xf32> to vector<64xf32>
    %77 = vector.shape_cast %76 : vector<64xf32> to vector<64x1xf32>
    %78 = tpu.reciprocal %77 {approx = true} : vector<64x1xf32> -> vector<64x1xf32>
    %79 = vector.broadcast %78 : vector<64x1xf32> to vector<64x64xf32>
    %80 = arith.mulf %75, %79 : vector<64x64xf32>
    %cst_27 = arith.constant dense<0.000000e+00> : vector<64x8xf32>
    %81 = tpu.matmul %80, %66, %cst_27 {dimension_numbers = #tpu.dot_dimension_numbers<[1], [0], [0], [1], [0, 0, 1, 1], [], []>} : vector<64x64xf32>, vector<64x8xf32>, vector<64x8xf32> -> vector<64x8xf32>
    %82 = vector.extract_strided_slice %81 {offsets = [0, 0], sizes = [16, 8], strides = [1, 1]} : vector<64x8xf32> to vector<16x8xf32>
    %83 = vector.extract_strided_slice %81 {offsets = [16, 0], sizes = [16, 8], strides = [1, 1]} : vector<64x8xf32> to vector<16x8xf32>
    %84 = vector.extract_strided_slice %81 {offsets = [32, 0], sizes = [16, 8], strides = [1, 1]} : vector<64x8xf32> to vector<16x8xf32>
    %85 = vector.extract_strided_slice %81 {offsets = [48, 0], sizes = [16, 8], strides = [1, 1]} : vector<64x8xf32> to vector<16x8xf32>
    %86 = tpu.concatenate %82, %83, %84, %85 in 1 : vector<16x8xf32>, vector<16x8xf32>, vector<16x8xf32>, vector<16x8xf32> -> vector<16x32xf32>
    %c221 = arith.constant 221 : index
    %c0_28 = arith.constant 0 : index
    %87 = vector.load %arg2[%c221, %c0_28] : memref<848x128xf32, #tpu.memory_space<vmem>>, vector<32x32xf32>
    %cst_29 = arith.constant dense<0.000000e+00> : vector<16x32xf32>
    %88 = tpu.matmul %86, %87, %cst_29 {dimension_numbers = #tpu.dot_dimension_numbers<[1], [0], [0], [1], [0, 0, 1, 1], [], []>} : vector<16x32xf32>, vector<32x32xf32>, vector<16x32xf32> -> vector<16x32xf32>
    %89 = arith.addf %20, %88 : vector<16x32xf32>
    %c253 = arith.constant 253 : index
    %c0_30 = arith.constant 0 : index
    %90 = vector.load %arg2[%c253, %c0_30] : memref<848x128xf32, #tpu.memory_space<vmem>>, vector<1x32xf32>
    %91 = vector.broadcast %90 : vector<1x32xf32> to vector<16x32xf32>
    %92 = arith.addf %89, %91 : vector<16x32xf32>
    %c254 = arith.constant 254 : index
    %c0_31 = arith.constant 0 : index
    %93 = vector.load %arg2[%c254, %c0_31] : memref<848x128xf32, #tpu.memory_space<vmem>>, vector<1x32xf32>
    %c255 = arith.constant 255 : index
    %c0_32 = arith.constant 0 : index
    %94 = vector.load %arg2[%c255, %c0_32] : memref<848x128xf32, #tpu.memory_space<vmem>>, vector<1x32xf32>
    %cst_33 = arith.constant dense<0.000000e+00> : vector<16xf32>
    %95 = vector.multi_reduction <add>, %92, %cst_33 [1] : vector<16x32xf32> to vector<16xf32>
    %96 = vector.shape_cast %95 : vector<16xf32> to vector<16x1xf32>
    %cst_34 = arith.constant 3.200000e+01 : f32
    %97 = vector.broadcast %cst_34 : f32 to vector<16x1xf32>
    %98 = arith.divf %96, %97 : vector<16x1xf32>
    %99 = vector.broadcast %98 : vector<16x1xf32> to vector<16x32xf32>
    %100 = arith.subf %92, %99 : vector<16x32xf32>
    %101 = arith.mulf %100, %100 : vector<16x32xf32>
    %cst_35 = arith.constant dense<0.000000e+00> : vector<16xf32>
    %102 = vector.multi_reduction <add>, %101, %cst_35 [1] : vector<16x32xf32> to vector<16xf32>
    %103 = vector.shape_cast %102 : vector<16xf32> to vector<16x1xf32>
    %cst_36 = arith.constant 3.200000e+01 : f32
    %104 = vector.broadcast %cst_36 : f32 to vector<16x1xf32>
    %105 = arith.divf %103, %104 : vector<16x1xf32>
    %cst_37 = arith.constant 9.99999974E-6 : f32
    %106 = vector.broadcast %cst_37 : f32 to vector<16x1xf32>
    %107 = arith.addf %105, %106 : vector<16x1xf32>
    %108 = math.rsqrt %107 : vector<16x1xf32>
    %109 = vector.broadcast %108 : vector<16x1xf32> to vector<16x32xf32>
    %110 = arith.mulf %100, %109 : vector<16x32xf32>
    %111 = vector.broadcast %93 : vector<1x32xf32> to vector<16x32xf32>
    %112 = arith.mulf %110, %111 : vector<16x32xf32>
    %113 = vector.broadcast %94 : vector<1x32xf32> to vector<16x32xf32>
    %114 = arith.addf %112, %113 : vector<16x32xf32>
    %c256 = arith.constant 256 : index
    %c0_38 = arith.constant 0 : index
    %115 = vector.load %arg2[%c256, %c0_38] : memref<848x128xf32, #tpu.memory_space<vmem>>, vector<32x64xf32>
    %cst_39 = arith.constant dense<0.000000e+00> : vector<16x64xf32>
    %116 = tpu.matmul %114, %115, %cst_39 {dimension_numbers = #tpu.dot_dimension_numbers<[1], [0], [0], [1], [0, 0, 1, 1], [], []>} : vector<16x32xf32>, vector<32x64xf32>, vector<16x64xf32> -> vector<16x64xf32>
    %c288 = arith.constant 288 : index
    %c0_40 = arith.constant 0 : index
    %117 = vector.load %arg2[%c288, %c0_40] : memref<848x128xf32, #tpu.memory_space<vmem>>, vector<1x64xf32>
    %118 = vector.broadcast %117 : vector<1x64xf32> to vector<16x64xf32>
    %119 = arith.addf %116, %118 : vector<16x64xf32>
    %120 = arith.mulf %119, %119 : vector<16x64xf32>
    %121 = arith.mulf %119, %120 : vector<16x64xf32>
    %cst_41 = arith.constant 4.471500e-02 : f32
    %122 = vector.broadcast %cst_41 : f32 to vector<16x64xf32>
    %123 = arith.mulf %122, %121 : vector<16x64xf32>
    %124 = arith.addf %119, %123 : vector<16x64xf32>
    %cst_42 = arith.constant 0.797884583 : f32
    %125 = vector.broadcast %cst_42 : f32 to vector<16x64xf32>
    %126 = arith.mulf %125, %124 : vector<16x64xf32>
    %127 = math.tanh %126 : vector<16x64xf32>
    %cst_43 = arith.constant 1.000000e+00 : f32
    %128 = vector.broadcast %cst_43 : f32 to vector<16x64xf32>
    %129 = arith.addf %128, %127 : vector<16x64xf32>
    %cst_44 = arith.constant 5.000000e-01 : f32
    %130 = vector.broadcast %cst_44 : f32 to vector<16x64xf32>
    %131 = arith.mulf %130, %129 : vector<16x64xf32>
    %132 = arith.mulf %119, %131 : vector<16x64xf32>
    %c289 = arith.constant 289 : index
    %c0_45 = arith.constant 0 : index
    %133 = vector.load %arg2[%c289, %c0_45] : memref<848x128xf32, #tpu.memory_space<vmem>>, vector<64x32xf32>
    %cst_46 = arith.constant dense<0.000000e+00> : vector<16x32xf32>
    %134 = tpu.matmul %132, %133, %cst_46 {dimension_numbers = #tpu.dot_dimension_numbers<[1], [0], [0], [1], [0, 0, 1, 1], [], []>} : vector<16x64xf32>, vector<64x32xf32>, vector<16x32xf32> -> vector<16x32xf32>
    %135 = arith.addf %92, %134 : vector<16x32xf32>
    %c353 = arith.constant 353 : index
    %c0_47 = arith.constant 0 : index
    %136 = vector.load %arg2[%c353, %c0_47] : memref<848x128xf32, #tpu.memory_space<vmem>>, vector<1x32xf32>
    %137 = vector.broadcast %136 : vector<1x32xf32> to vector<16x32xf32>
    %138 = arith.addf %135, %137 : vector<16x32xf32>
    %c354 = arith.constant 354 : index
    %c0_48 = arith.constant 0 : index
    %139 = vector.load %arg2[%c354, %c0_48] : memref<848x128xf32, #tpu.memory_space<vmem>>, vector<1x32xf32>
    %c355 = arith.constant 355 : index
    %c0_49 = arith.constant 0 : index
    %140 = vector.load %arg2[%c355, %c0_49] : memref<848x128xf32, #tpu.memory_space<vmem>>, vector<1x32xf32>
    %cst_50 = arith.constant dense<0.000000e+00> : vector<16xf32>
    %141 = vector.multi_reduction <add>, %138, %cst_50 [1] : vector<16x32xf32> to vector<16xf32>
    %142 = vector.shape_cast %141 : vector<16xf32> to vector<16x1xf32>
    %cst_51 = arith.constant 3.200000e+01 : f32
    %143 = vector.broadcast %cst_51 : f32 to vector<16x1xf32>
    %144 = arith.divf %142, %143 : vector<16x1xf32>
    %145 = vector.broadcast %144 : vector<16x1xf32> to vector<16x32xf32>
    %146 = arith.subf %138, %145 : vector<16x32xf32>
    %147 = arith.mulf %146, %146 : vector<16x32xf32>
    %cst_52 = arith.constant dense<0.000000e+00> : vector<16xf32>
    %148 = vector.multi_reduction <add>, %147, %cst_52 [1] : vector<16x32xf32> to vector<16xf32>
    %149 = vector.shape_cast %148 : vector<16xf32> to vector<16x1xf32>
    %cst_53 = arith.constant 3.200000e+01 : f32
    %150 = vector.broadcast %cst_53 : f32 to vector<16x1xf32>
    %151 = arith.divf %149, %150 : vector<16x1xf32>
    %cst_54 = arith.constant 9.99999974E-6 : f32
    %152 = vector.broadcast %cst_54 : f32 to vector<16x1xf32>
    %153 = arith.addf %151, %152 : vector<16x1xf32>
    %154 = math.rsqrt %153 : vector<16x1xf32>
    %155 = vector.broadcast %154 : vector<16x1xf32> to vector<16x32xf32>
    %156 = arith.mulf %146, %155 : vector<16x32xf32>
    %157 = vector.broadcast %139 : vector<1x32xf32> to vector<16x32xf32>
    %158 = arith.mulf %156, %157 : vector<16x32xf32>
    %159 = vector.broadcast %140 : vector<1x32xf32> to vector<16x32xf32>
    %160 = arith.addf %158, %159 : vector<16x32xf32>
    %c356 = arith.constant 356 : index
    %c0_55 = arith.constant 0 : index
    %161 = vector.load %arg2[%c356, %c0_55] : memref<848x128xf32, #tpu.memory_space<vmem>>, vector<32x96xf32>
    %cst_56 = arith.constant dense<0.000000e+00> : vector<16x96xf32>
    %162 = tpu.matmul %160, %161, %cst_56 {dimension_numbers = #tpu.dot_dimension_numbers<[1], [0], [0], [1], [0, 0, 1, 1], [], []>} : vector<16x32xf32>, vector<32x96xf32>, vector<16x96xf32> -> vector<16x96xf32>
    %c388 = arith.constant 388 : index
    %c0_57 = arith.constant 0 : index
    %163 = vector.load %arg2[%c388, %c0_57] : memref<848x128xf32, #tpu.memory_space<vmem>>, vector<1x96xf32>
    %164 = vector.broadcast %163 : vector<1x96xf32> to vector<16x96xf32>
    %165 = arith.addf %162, %164 : vector<16x96xf32>
    %166 = vector.extract_strided_slice %165 {offsets = [0, 0], sizes = [16, 32], strides = [1, 1]} : vector<16x96xf32> to vector<16x32xf32>
    %167 = vector.extract_strided_slice %165 {offsets = [0, 32], sizes = [16, 32], strides = [1, 1]} : vector<16x96xf32> to vector<16x32xf32>
    %168 = vector.extract_strided_slice %165 {offsets = [0, 64], sizes = [16, 32], strides = [1, 1]} : vector<16x96xf32> to vector<16x32xf32>
    %169 = vector.extract_strided_slice %166 {offsets = [0, 0], sizes = [16, 8], strides = [1, 1]} : vector<16x32xf32> to vector<16x8xf32>
    %170 = vector.extract_strided_slice %166 {offsets = [0, 8], sizes = [16, 8], strides = [1, 1]} : vector<16x32xf32> to vector<16x8xf32>
    %171 = vector.extract_strided_slice %166 {offsets = [0, 16], sizes = [16, 8], strides = [1, 1]} : vector<16x32xf32> to vector<16x8xf32>
    %172 = vector.extract_strided_slice %166 {offsets = [0, 24], sizes = [16, 8], strides = [1, 1]} : vector<16x32xf32> to vector<16x8xf32>
    %173 = tpu.concatenate %169, %170, %171, %172 in 0 : vector<16x8xf32>, vector<16x8xf32>, vector<16x8xf32>, vector<16x8xf32> -> vector<64x8xf32>
    %174 = vector.extract_strided_slice %167 {offsets = [0, 0], sizes = [16, 8], strides = [1, 1]} : vector<16x32xf32> to vector<16x8xf32>
    %175 = vector.extract_strided_slice %167 {offsets = [0, 8], sizes = [16, 8], strides = [1, 1]} : vector<16x32xf32> to vector<16x8xf32>
    %176 = vector.extract_strided_slice %167 {offsets = [0, 16], sizes = [16, 8], strides = [1, 1]} : vector<16x32xf32> to vector<16x8xf32>
    %177 = vector.extract_strided_slice %167 {offsets = [0, 24], sizes = [16, 8], strides = [1, 1]} : vector<16x32xf32> to vector<16x8xf32>
    %178 = tpu.concatenate %174, %175, %176, %177 in 0 : vector<16x8xf32>, vector<16x8xf32>, vector<16x8xf32>, vector<16x8xf32> -> vector<64x8xf32>
    %179 = vector.extract_strided_slice %168 {offsets = [0, 0], sizes = [16, 8], strides = [1, 1]} : vector<16x32xf32> to vector<16x8xf32>
    %180 = vector.extract_strided_slice %168 {offsets = [0, 8], sizes = [16, 8], strides = [1, 1]} : vector<16x32xf32> to vector<16x8xf32>
    %181 = vector.extract_strided_slice %168 {offsets = [0, 16], sizes = [16, 8], strides = [1, 1]} : vector<16x32xf32> to vector<16x8xf32>
    %182 = vector.extract_strided_slice %168 {offsets = [0, 24], sizes = [16, 8], strides = [1, 1]} : vector<16x32xf32> to vector<16x8xf32>
    %183 = tpu.concatenate %179, %180, %181, %182 in 0 : vector<16x8xf32>, vector<16x8xf32>, vector<16x8xf32>, vector<16x8xf32> -> vector<64x8xf32>
    %cst_58 = arith.constant dense<0.000000e+00> : vector<64x64xf32>
    %184 = tpu.matmul %173, %178, %cst_58 {dimension_numbers = #tpu.dot_dimension_numbers<[1], [1], [0], [0], [0, 0, 1, 0], [], []>} : vector<64x8xf32>, vector<64x8xf32>, vector<64x64xf32> -> vector<64x64xf32>
    %cst_59 = arith.constant 0.353553385 : f32
    %185 = vector.broadcast %cst_59 : f32 to vector<64x64xf32>
    %186 = arith.mulf %184, %185 : vector<64x64xf32>
    %187 = arith.addf %186, %21 : vector<64x64xf32>
    %cst_60 = arith.constant dense<0xFF800000> : vector<64xf32>
    %188 = vector.multi_reduction <maximumf>, %187, %cst_60 [1] : vector<64x64xf32> to vector<64xf32>
    %189 = vector.shape_cast %188 : vector<64xf32> to vector<64x1xf32>
    %190 = vector.broadcast %189 : vector<64x1xf32> to vector<64x64xf32>
    %191 = arith.subf %187, %190 : vector<64x64xf32>
    %192 = math.exp %191 : vector<64x64xf32>
    %cst_61 = arith.constant dense<0.000000e+00> : vector<64xf32>
    %193 = vector.multi_reduction <add>, %192, %cst_61 [1] : vector<64x64xf32> to vector<64xf32>
    %194 = vector.shape_cast %193 : vector<64xf32> to vector<64x1xf32>
    %195 = tpu.reciprocal %194 {approx = true} : vector<64x1xf32> -> vector<64x1xf32>
    %196 = vector.broadcast %195 : vector<64x1xf32> to vector<64x64xf32>
    %197 = arith.mulf %192, %196 : vector<64x64xf32>
    %cst_62 = arith.constant dense<0.000000e+00> : vector<64x8xf32>
    %198 = tpu.matmul %197, %183, %cst_62 {dimension_numbers = #tpu.dot_dimension_numbers<[1], [0], [0], [1], [0, 0, 1, 1], [], []>} : vector<64x64xf32>, vector<64x8xf32>, vector<64x8xf32> -> vector<64x8xf32>
    %199 = vector.extract_strided_slice %198 {offsets = [0, 0], sizes = [16, 8], strides = [1, 1]} : vector<64x8xf32> to vector<16x8xf32>
    %200 = vector.extract_strided_slice %198 {offsets = [16, 0], sizes = [16, 8], strides = [1, 1]} : vector<64x8xf32> to vector<16x8xf32>
    %201 = vector.extract_strided_slice %198 {offsets = [32, 0], sizes = [16, 8], strides = [1, 1]} : vector<64x8xf32> to vector<16x8xf32>
    %202 = vector.extract_strided_slice %198 {offsets = [48, 0], sizes = [16, 8], strides = [1, 1]} : vector<64x8xf32> to vector<16x8xf32>
    %203 = tpu.concatenate %199, %200, %201, %202 in 1 : vector<16x8xf32>, vector<16x8xf32>, vector<16x8xf32>, vector<16x8xf32> -> vector<16x32xf32>
    %c389 = arith.constant 389 : index
    %c0_63 = arith.constant 0 : index
    %204 = vector.load %arg2[%c389, %c0_63] : memref<848x128xf32, #tpu.memory_space<vmem>>, vector<32x32xf32>
    %cst_64 = arith.constant dense<0.000000e+00> : vector<16x32xf32>
    %205 = tpu.matmul %203, %204, %cst_64 {dimension_numbers = #tpu.dot_dimension_numbers<[1], [0], [0], [1], [0, 0, 1, 1], [], []>} : vector<16x32xf32>, vector<32x32xf32>, vector<16x32xf32> -> vector<16x32xf32>
    %206 = arith.addf %138, %205 : vector<16x32xf32>
    %c421 = arith.constant 421 : index
    %c0_65 = arith.constant 0 : index
    %207 = vector.load %arg2[%c421, %c0_65] : memref<848x128xf32, #tpu.memory_space<vmem>>, vector<1x32xf32>
    %208 = vector.broadcast %207 : vector<1x32xf32> to vector<16x32xf32>
    %209 = arith.addf %206, %208 : vector<16x32xf32>
    %c422 = arith.constant 422 : index
    %c0_66 = arith.constant 0 : index
    %210 = vector.load %arg2[%c422, %c0_66] : memref<848x128xf32, #tpu.memory_space<vmem>>, vector<1x32xf32>
    %c423 = arith.constant 423 : index
    %c0_67 = arith.constant 0 : index
    %211 = vector.load %arg2[%c423, %c0_67] : memref<848x128xf32, #tpu.memory_space<vmem>>, vector<1x32xf32>
    %cst_68 = arith.constant dense<0.000000e+00> : vector<16xf32>
    %212 = vector.multi_reduction <add>, %209, %cst_68 [1] : vector<16x32xf32> to vector<16xf32>
    %213 = vector.shape_cast %212 : vector<16xf32> to vector<16x1xf32>
    %cst_69 = arith.constant 3.200000e+01 : f32
    %214 = vector.broadcast %cst_69 : f32 to vector<16x1xf32>
    %215 = arith.divf %213, %214 : vector<16x1xf32>
    %216 = vector.broadcast %215 : vector<16x1xf32> to vector<16x32xf32>
    %217 = arith.subf %209, %216 : vector<16x32xf32>
    %218 = arith.mulf %217, %217 : vector<16x32xf32>
    %cst_70 = arith.constant dense<0.000000e+00> : vector<16xf32>
    %219 = vector.multi_reduction <add>, %218, %cst_70 [1] : vector<16x32xf32> to vector<16xf32>
    %220 = vector.shape_cast %219 : vector<16xf32> to vector<16x1xf32>
    %cst_71 = arith.constant 3.200000e+01 : f32
    %221 = vector.broadcast %cst_71 : f32 to vector<16x1xf32>
    %222 = arith.divf %220, %221 : vector<16x1xf32>
    %cst_72 = arith.constant 9.99999974E-6 : f32
    %223 = vector.broadcast %cst_72 : f32 to vector<16x1xf32>
    %224 = arith.addf %222, %223 : vector<16x1xf32>
    %225 = math.rsqrt %224 : vector<16x1xf32>
    %226 = vector.broadcast %225 : vector<16x1xf32> to vector<16x32xf32>
    %227 = arith.mulf %217, %226 : vector<16x32xf32>
    %228 = vector.broadcast %210 : vector<1x32xf32> to vector<16x32xf32>
    %229 = arith.mulf %227, %228 : vector<16x32xf32>
    %230 = vector.broadcast %211 : vector<1x32xf32> to vector<16x32xf32>
    %231 = arith.addf %229, %230 : vector<16x32xf32>
    %c424 = arith.constant 424 : index
    %c0_73 = arith.constant 0 : index
    %232 = vector.load %arg2[%c424, %c0_73] : memref<848x128xf32, #tpu.memory_space<vmem>>, vector<32x64xf32>
    %cst_74 = arith.constant dense<0.000000e+00> : vector<16x64xf32>
    %233 = tpu.matmul %231, %232, %cst_74 {dimension_numbers = #tpu.dot_dimension_numbers<[1], [0], [0], [1], [0, 0, 1, 1], [], []>} : vector<16x32xf32>, vector<32x64xf32>, vector<16x64xf32> -> vector<16x64xf32>
    %c456 = arith.constant 456 : index
    %c0_75 = arith.constant 0 : index
    %234 = vector.load %arg2[%c456, %c0_75] : memref<848x128xf32, #tpu.memory_space<vmem>>, vector<1x64xf32>
    %235 = vector.broadcast %234 : vector<1x64xf32> to vector<16x64xf32>
    %236 = arith.addf %233, %235 : vector<16x64xf32>
    %237 = arith.mulf %236, %236 : vector<16x64xf32>
    %238 = arith.mulf %236, %237 : vector<16x64xf32>
    %cst_76 = arith.constant 4.471500e-02 : f32
    %239 = vector.broadcast %cst_76 : f32 to vector<16x64xf32>
    %240 = arith.mulf %239, %238 : vector<16x64xf32>
    %241 = arith.addf %236, %240 : vector<16x64xf32>
    %cst_77 = arith.constant 0.797884583 : f32
    %242 = vector.broadcast %cst_77 : f32 to vector<16x64xf32>
    %243 = arith.mulf %242, %241 : vector<16x64xf32>
    %244 = math.tanh %243 : vector<16x64xf32>
    %cst_78 = arith.constant 1.000000e+00 : f32
    %245 = vector.broadcast %cst_78 : f32 to vector<16x64xf32>
    %246 = arith.addf %245, %244 : vector<16x64xf32>
    %cst_79 = arith.constant 5.000000e-01 : f32
    %247 = vector.broadcast %cst_79 : f32 to vector<16x64xf32>
    %248 = arith.mulf %247, %246 : vector<16x64xf32>
    %249 = arith.mulf %236, %248 : vector<16x64xf32>
    %c457 = arith.constant 457 : index
    %c0_80 = arith.constant 0 : index
    %250 = vector.load %arg2[%c457, %c0_80] : memref<848x128xf32, #tpu.memory_space<vmem>>, vector<64x32xf32>
    %cst_81 = arith.constant dense<0.000000e+00> : vector<16x32xf32>
    %251 = tpu.matmul %249, %250, %cst_81 {dimension_numbers = #tpu.dot_dimension_numbers<[1], [0], [0], [1], [0, 0, 1, 1], [], []>} : vector<16x64xf32>, vector<64x32xf32>, vector<16x32xf32> -> vector<16x32xf32>
    %252 = arith.addf %209, %251 : vector<16x32xf32>
    %c521 = arith.constant 521 : index
    %c0_82 = arith.constant 0 : index
    %253 = vector.load %arg2[%c521, %c0_82] : memref<848x128xf32, #tpu.memory_space<vmem>>, vector<1x32xf32>
    %254 = vector.broadcast %253 : vector<1x32xf32> to vector<16x32xf32>
    %255 = arith.addf %252, %254 : vector<16x32xf32>
    %256 = vector.extract_strided_slice %255 {offsets = [0, 0], sizes = [2, 32], strides = [1, 1]} : vector<16x32xf32> to vector<2x32xf32>
    %257 = vector.extract_strided_slice %255 {offsets = [2, 0], sizes = [2, 32], strides = [1, 1]} : vector<16x32xf32> to vector<2x32xf32>
    %258 = vector.extract_strided_slice %255 {offsets = [4, 0], sizes = [2, 32], strides = [1, 1]} : vector<16x32xf32> to vector<2x32xf32>
    %259 = vector.extract_strided_slice %255 {offsets = [6, 0], sizes = [2, 32], strides = [1, 1]} : vector<16x32xf32> to vector<2x32xf32>
    %260 = vector.extract_strided_slice %255 {offsets = [8, 0], sizes = [2, 32], strides = [1, 1]} : vector<16x32xf32> to vector<2x32xf32>
    %261 = vector.extract_strided_slice %255 {offsets = [10, 0], sizes = [2, 32], strides = [1, 1]} : vector<16x32xf32> to vector<2x32xf32>
    %262 = vector.extract_strided_slice %255 {offsets = [12, 0], sizes = [2, 32], strides = [1, 1]} : vector<16x32xf32> to vector<2x32xf32>
    %263 = vector.extract_strided_slice %255 {offsets = [14, 0], sizes = [2, 32], strides = [1, 1]} : vector<16x32xf32> to vector<2x32xf32>
    %264 = tpu.concatenate %256, %257, %258, %259, %260, %261, %262, %263 in 1 : vector<2x32xf32>, vector<2x32xf32>, vector<2x32xf32>, vector<2x32xf32>, vector<2x32xf32>, vector<2x32xf32>, vector<2x32xf32>, vector<2x32xf32> -> vector<2x256xf32>
    %c522 = arith.constant 522 : index
    %c0_83 = arith.constant 0 : index
    %265 = vector.load %arg2[%c522, %c0_83] : memref<848x128xf32, #tpu.memory_space<vmem>>, vector<256x64xf32>
    %cst_84 = arith.constant dense<0.000000e+00> : vector<2x64xf32>
    %266 = tpu.matmul %264, %265, %cst_84 {dimension_numbers = #tpu.dot_dimension_numbers<[1], [0], [0], [1], [0, 0, 1, 1], [], []>} : vector<2x256xf32>, vector<256x64xf32>, vector<2x64xf32> -> vector<2x64xf32>
    %c778 = arith.constant 778 : index
    %c0_85 = arith.constant 0 : index
    %267 = vector.load %arg2[%c778, %c0_85] : memref<848x128xf32, #tpu.memory_space<vmem>>, vector<1x64xf32>
    %268 = vector.broadcast %267 : vector<1x64xf32> to vector<2x64xf32>
    %269 = arith.addf %266, %268 : vector<2x64xf32>
    %cst_86 = arith.constant 0.000000e+00 : f32
    %270 = vector.broadcast %cst_86 : f32 to vector<2x64xf32>
    %271 = arith.cmpf ogt, %269, %270 : vector<2x64xf32>
    %272 = math.exp %269 : vector<2x64xf32>
    %cst_87 = arith.constant 1.000000e+00 : f32
    %273 = vector.broadcast %cst_87 : f32 to vector<2x64xf32>
    %274 = arith.subf %272, %273 : vector<2x64xf32>
    %275 = arith.select %271, %269, %274 : vector<2x64xi1>, vector<2x64xf32>
    %c779 = arith.constant 779 : index
    %c0_88 = arith.constant 0 : index
    %276 = vector.load %arg2[%c779, %c0_88] : memref<848x128xf32, #tpu.memory_space<vmem>>, vector<64x4xf32>
    %cst_89 = arith.constant dense<0.000000e+00> : vector<2x4xf32>
    %277 = tpu.matmul %275, %276, %cst_89 {dimension_numbers = #tpu.dot_dimension_numbers<[1], [0], [0], [1], [0, 0, 1, 1], [], []>} : vector<2x64xf32>, vector<64x4xf32>, vector<2x4xf32> -> vector<2x4xf32>
    %c843 = arith.constant 843 : index
    %c0_90 = arith.constant 0 : index
    %278 = vector.load %arg2[%c843, %c0_90] : memref<848x128xf32, #tpu.memory_space<vmem>>, vector<1x4xf32>
    %279 = vector.broadcast %278 : vector<1x4xf32> to vector<2x4xf32>
    %280 = arith.addf %277, %279 : vector<2x4xf32>
    %c0_91 = arith.constant 0 : index
    %c0_92 = arith.constant 0 : index
    %281 = vector.load %arg3[%c0_91, %c0_92] : memref<2x4xf32, #tpu.memory_space<vmem>>, vector<2x4xf32>
    tpu.vector_store %arg3[%c0_91, %c0_92], %280 {strides = array<i32>} : memref<2x4xf32, #tpu.memory_space<vmem>>, vector<2x4xf32>,
    %cst_93 = arith.constant dense<0xFF800000> : vector<2xf32>
    %282 = vector.multi_reduction <maximumf>, %280, %cst_93 [1] : vector<2x4xf32> to vector<2xf32>
    %283 = vector.shape_cast %282 : vector<2xf32> to vector<2x1xf32>
    %284 = vector.broadcast %283 : vector<2x1xf32> to vector<2x4xf32>
    %285 = arith.subf %280, %284 : vector<2x4xf32>
    %286 = math.exp %285 : vector<2x4xf32>
    %cst_94 = arith.constant dense<0.000000e+00> : vector<2xf32>
    %287 = vector.multi_reduction <add>, %286, %cst_94 [1] : vector<2x4xf32> to vector<2xf32>
    %288 = vector.shape_cast %287 : vector<2xf32> to vector<2x1xf32>
    %289 = math.log %288 : vector<2x1xf32>
    %290 = vector.broadcast %289 : vector<2x1xf32> to vector<2x4xf32>
    %291 = arith.subf %285, %290 : vector<2x4xf32>
    %c0_95 = arith.constant 0 : index
    %c0_96 = arith.constant 0 : index
    %292 = vector.load %arg1[%c0_95, %c0_96] : memref<2x4xf32, #tpu.memory_space<vmem>>, vector<2x4xf32>
    %293 = arith.mulf %292, %291 : vector<2x4xf32>
    %cst_97 = arith.constant dense<0.000000e+00> : vector<2xf32>
    %294 = vector.multi_reduction <add>, %293, %cst_97 [1] : vector<2x4xf32> to vector<2xf32>
    %295 = vector.shape_cast %294 : vector<2xf32> to vector<2x1xf32>
    %cst_98 = arith.constant 0.000000e+00 : f32
    %296 = vector.broadcast %cst_98 : f32 to vector<2x1xf32>
    %297 = arith.subf %296, %295 : vector<2x1xf32>
    %cst_99 = arith.constant dense<0.000000e+00> : vector<1xf32>
    %298 = vector.multi_reduction <add>, %297, %cst_99 [0] : vector<2x1xf32> to vector<1xf32>
    %299 = vector.shape_cast %298 : vector<1xf32> to vector<1x1xf32>
    %cst_100 = arith.constant 5.000000e-01 : f32
    %300 = vector.broadcast %cst_100 : f32 to vector<1x1xf32>
    %301 = arith.mulf %299, %300 : vector<1x1xf32>
    %c0_101 = arith.constant 0 : index
    %c0_102 = arith.constant 0 : index
    %302 = vector.load %arg4[%c0_101, %c0_102] : memref<1x1xf32, #tpu.memory_space<vmem>>, vector<1x1xf32>
    tpu.vector_store %arg4[%c0_101, %c0_102], %301 {strides = array<i32>} : memref<1x1xf32, #tpu.memory_space<vmem>>, vector<1x1xf32>,
    return
  }
}

</mosaic_0001>

<llo_original>
// kernel: dewave_forward.1
$region0: #{dewave_forward.1}
  #allocation0 [shape = 'u32[]', space=smem, size = 0x4, offset = 0x4, fixed_abs, tag = 'smem constant byte address 0x4 - core index']
  #allocation1 [shape = 'u32[72,128]{1,0:T(1,128)}', space=vmem, size = 0x9000, scoped, tag = 'internal scratch']
  %s0 = inlined_call_operand.vmem [shape: f32[112,72], index: 0, kind: input, shape index: {}]
  %s1 = inlined_call_operand.vmem [shape: f32[2,4], index: 1, kind: input, shape index: {}]
  %s2 = inlined_call_operand.vmem [shape: f32[848,128], index: 2, kind: input, shape index: {}]
  %s3 = inlined_call_operand.hbm [shape: f32[2,4], index: 3, kind: output, shape index: {0}]
  %s4 = inlined_call_operand.hbm [shape: f32[1,1], index: 4, kind: output, shape index: {1}]
  %5 = xla_tuple %s3, %s4
  %s6 = sld [smem:[#allocation0]]
  $region30: #{dewave_forward.1} parent=0
    _
  %s8 = ssub.s32 1, %s6
  %s9 = scalar_select 0, %s8, %s6
  $region1: #{dewave_forward.1} parent=0
    #allocation2 [shape = 'u8[1024]{0}', space=vmem, size = 0x400, scoped, tag = 'output window, operand 0, single buffered']
    #allocation3 [shape = 's32[1]{0}', space=sflag, size = 0x4, scoped, tag = 'scoped memory for dewave_forward.1']
    #allocation4 [shape = 'u8[512]{0}', space=vmem, size = 0x400, scoped, tag = 'output window, operand 1, single buffered']
    #allocation5 [shape = 's32[1]{0}', space=sflag, size = 0x4, scoped, tag = 'scoped memory for dewave_forward.1']
    %10 = vsyncpa [#allocation3], 0
    %11 = vsyncpa [#allocation5], 0
    // Predicated region
    $region2: #{dewave_forward.1} parent=1 // pred_check
      _
    $region3: #{dewave_forward.1} parent=1 // pred_check_branch
      %13 = sbr.rel (0) target = $region5
    $region4: #{dewave_forward.1} parent=1 // pred_region
      _
    $region5: #{dewave_forward.1} parent=1 // pred_fallthru
      _
    // Predicated region
    $region6: #{dewave_forward.1} parent=1 // pred_check
      _
    $region7: #{dewave_forward.1} parent=1 // pred_check_branch
      %15 = sbr.rel (0) target = $region9
    $region8: #{dewave_forward.1} parent=1 // pred_region
      _
    $region9: #{dewave_forward.1} parent=1 // pred_fallthru
      _
    // Predicated region
    $region10: #{dewave_forward.1} parent=1 // pred_check
      _
    $region11: #{dewave_forward.1} parent=1 // pred_check_branch
      %17 = sbr.rel (0) target = $region13
    $region12: #{dewave_forward.1} parent=1 // pred_region
      _
    $region13: #{dewave_forward.1} parent=1 // pred_fallthru
      _
    %v18 = vld [vmem:[%s0] sm:$0xff]
    %v19 = vld [vmem:[%s0 + $0x8] sm:$0xff]
    %v20 = vld [vmem:[%s0 + $0x10] sm:$0xff]
    %v21 = vld [vmem:[%s0 + $0x18] sm:$0xff]
    %v22 = vld [vmem:[%s0 + $0x20] sm:$0xff]
    %v23 = vld [vmem:[%s0 + $0x28] sm:$0xff]
    %v24 = vld [vmem:[%s0 + $0x30] sm:$0xff]
    %v25 = vld [vmem:[%s0 + $0x38] sm:$0xff]
    %v26 = vld [vmem:[%s0 + $0x40] sm:$0xff]
    %v27 = vld [vmem:[%s0 + $0x48] sm:$0xff]
    %v28 = vld [vmem:[%s0 + $0x50] sm:$0xff]
    %v29 = vld [vmem:[%s0 + $0x58] sm:$0xff]
    %v30 = vld [vmem:[%s0 + $0x60] sm:$0xff]
    %v31 = vld [vmem:[%s0 + $0x68] sm:$0xff]
    %v32 = vld [vmem:[%s2 + $0x60] sm:$0xff]
    %v33 = vld [vmem:[%s2 + $0x68] sm:$0xff]
    %v34 = vld [vmem:[%s2 + $0x70] sm:$0xff]
    %v35 = vld [vmem:[%s2 + $0x78] sm:$0xff]
    %v36 = vld [vmem:[%s2 + $0x80] sm:$0xff]
    %v37 = vld [vmem:[%s2 + $0x88] sm:$0xff]
    %v38 = vld [vmem:[%s2 + $0x90] sm:$0xff]
    %v39 = vld [vmem:[%s2 + $0x98] sm:$0xff]
    %v40 = vld [vmem:[%s2 + $0xa0] sm:$0xff]
    %v41 = vld [vmem:[%s2 + $0xa8] sm:$0x1]
    %v42 = vperm.slane %v41, 0
    %vm43 = vcmask 588800
    %v45 = vsel %vm43, %v18, 0
    %v48 = vsel %vm43, %v19, 0
    %v51 = vsel %vm43, %v20, 0
    %v54 = vsel %vm43, %v21, 0
    %v57 = vsel %vm43, %v22, 0
    %v60 = vsel %vm43, %v23, 0
    %v63 = vsel %vm43, %v24, 0
    %v66 = vsel %vm43, %v25, 0
    %v69 = vsel %vm43, %v26, 0
    %v72 = vsel %vm43, %v27, 0
    %v75 = vsel %vm43, %v28, 0
    %v78 = vsel %vm43, %v29, 0
    %v81 = vsel %vm43, %v30, 0
    %v84 = vsel %vm43, %v31, 0
    %86 = vmatpush.msra.mxu0 0.0
    %87 = vmatpush.msra.mxu0 0.0
    %88 = vmatpush.msra.mxu0 0.0
    %89 = vmatpush.msra.mxu0 0.0
    %90 = vmatpush.msra.mxu0 0.0
    %91 = vmatpush.msra.mxu0 0.0
    %92 = vmatpush.msra.mxu0 0.0
    %93 = vmatpush.msra.mxu0 %v40
    %94 = vmatpush.msra.mxu0 %v39
    %95 = vmatpush.msra.mxu0 %v38
    %96 = vmatpush.msra.mxu0 %v37
    %97 = vmatpush.msra.mxu0 %v36
    %98 = vmatpush.msra.mxu0 %v35
    %99 = vmatpush.msra.mxu0 %v34
    %100 = vmatpush.msra.mxu0 %v33
    %101 = vmatpush.msra.mxu0 %v32
    %102 = vmatmul.f32.gmra.mxu0 %v45
    %v103 = vpop.f32.mrf.mxu0
    %v104 = vadd.f32 %v42, %v103
    %105 = vmatmul.f32.gmra.mxu0 %v48
    %v106 = vpop.f32.mrf.mxu0
    %v107 = vadd.f32 %v42, %v106
    %108 = vmatmul.f32.gmra.mxu0 %v51
    %v109 = vpop.f32.mrf.mxu0
    %v110 = vadd.f32 %v42, %v109
    %111 = vmatmul.f32.gmra.mxu0 %v54
    %v112 = vpop.f32.mrf.mxu0
    %v113 = vadd.f32 %v42, %v112
    %114 = vmatmul.f32.gmra.mxu0 %v57
    %v115 = vpop.f32.mrf.mxu0
    %v116 = vadd.f32 %v42, %v115
    %117 = vmatmul.f32.gmra.mxu0 %v60
    %v118 = vpop.f32.mrf.mxu0
    %v119 = vadd.f32 %v42, %v118
    %120 = vmatmul.f32.gmra.mxu0 %v63
    %v121 = vpop.f32.mrf.mxu0
    %v122 = vadd.f32 %v42, %v121
    %123 = vmatmul.f32.gmra.mxu0 %v66
    %v124 = vpop.f32.mrf.mxu0
    %v125 = vadd.f32 %v42, %v124
    %126 = vmatmul.f32.gmra.mxu0 %v69
    %v127 = vpop.f32.mrf.mxu0
    %v128 = vadd.f32 %v42, %v127
    %129 = vmatmul.f32.gmra.mxu0 %v72
    %v130 = vpop.f32.mrf.mxu0
    %v131 = vadd.f32 %v42, %v130
    %132 = vmatmul.f32.gmra.mxu0 %v75
    %v133 = vpop.f32.mrf.mxu0
    %v134 = vadd.f32 %v42, %v133
    %135 = vmatmul.f32.gmra.mxu0 %v78
    %v136 = vpop.f32.mrf.mxu0
    %v137 = vadd.f32 %v42, %v136
    %138 = vmatmul.f32.gmra.mxu0 %v81
    %v139 = vpop.f32.mrf.mxu0
    %v140 = vadd.f32 %v42, %v139
    %141 = vmatmul.f32.gmra.mxu0 %v84
    %v142 = vpop.f32.mrf.mxu0
    %v143 = vadd.f32 %v42, %v142
    %144 = vdwg.mxu0
    %vm145 = vcmp.gt.f32.partialorder %v104, 0.0
    %vm146 = vcmp.gt.f32.partialorder %v107, 0.0
    %vm147 = vcmp.gt.f32.partialorder %v110, 0.0
    %vm148 = vcmp.gt.f32.partialorder %v113, 0.0
    %vm149 = vcmp.gt.f32.partialorder %v116, 0.0
    %vm150 = vcmp.gt.f32.partialorder %v119, 0.0
    %vm151 = vcmp.gt.f32.partialorder %v122, 0.0
    %vm152 = vcmp.gt.f32.partialorder %v125, 0.0
    %vm153 = vcmp.gt.f32.partialorder %v128, 0.0
    %vm154 = vcmp.gt.f32.partialorder %v131, 0.0
    %vm155 = vcmp.gt.f32.partialorder %v134, 0.0
    %vm156 = vcmp.gt.f32.partialorder %v137, 0.0
    %vm157 = vcmp.gt.f32.partialorder %v140, 0.0
    %vm158 = vcmp.gt.f32.partialorder %v143, 0.0
    %v159 = vmul.f32 %v104, 1.442695
    %v160 = vpow.pop %v159
    %v161 = vmul.f32 %v107, 1.442695
    %v162 = vpow.pop %v161
    %v163 = vmul.f32 %v110, 1.442695
    %v164 = vpow.pop %v163
    %v165 = vmul.f32 %v113, 1.442695
    %v166 = vpow.pop %v165
    %v167 = vmul.f32 %v116, 1.442695
    %v168 = vpow.pop %v167
    %v169 = vmul.f32 %v119, 1.442695
    %v170 = vpow.pop %v169
    %v171 = vmul.f32 %v122, 1.442695
    %v172 = vpow.pop %v171
    %v173 = vmul.f32 %v125, 1.442695
    %v174 = vpow.pop %v173
    %v175 = vmul.f32 %v128, 1.442695
    %v176 = vpow.pop %v175
    %v177 = vmul.f32 %v131, 1.442695
    %v178 = vpow.pop %v177
    %v179 = vmul.f32 %v134, 1.442695
    %v180 = vpow.pop %v179
    %v181 = vmul.f32 %v137, 1.442695
    %v182 = vpow.pop %v181
    %v183 = vmul.f32 %v140, 1.442695
    %v184 = vpow.pop %v183
    %v185 = vmul.f32 %v143, 1.442695
    %v186 = vpow.pop %v185
    %v187 = vsub.f32 %v160, 1.0
    %v188 = vsub.f32 %v162, 1.0
    %v189 = vsub.f32 %v164, 1.0
    %v190 = vsub.f32 %v166, 1.0
    %v191 = vsub.f32 %v168, 1.0
    %v192 = vsub.f32 %v170, 1.0
    %v193 = vsub.f32 %v172, 1.0
    %v194 = vsub.f32 %v174, 1.0
    %v195 = vsub.f32 %v176, 1.0
    %v196 = vsub.f32 %v178, 1.0
    %v197 = vsub.f32 %v180, 1.0
    %v198 = vsub.f32 %v182, 1.0
    %v199 = vsub.f32 %v184, 1.0
    %v200 = vsub.f32 %v186, 1.0
    %v201 = vsel %vm145, %v104, %v187
    %v202 = vsel %vm146, %v107, %v188
    %v203 = vsel %vm147, %v110, %v189
    %v204 = vsel %vm148, %v113, %v190
    %v205 = vsel %vm149, %v116, %v191
    %v206 = vsel %vm150, %v119, %v192
    %v207 = vsel %vm151, %v122, %v193
    %v208 = vsel %vm152, %v125, %v194
    %v209 = vsel %vm153, %v128, %v195
    %v210 = vsel %vm154, %v131, %v196
    %v211 = vsel %vm155, %v134, %v197
    %v212 = vsel %vm156, %v137, %v198
    %v213 = vsel %vm157, %v140, %v199
    %v214 = vsel %vm158, %v143, %v200
    %v215 = vld [vmem:[%s2] sm:$0xff]
    %v216 = vld [vmem:[%s2 + $0x8] sm:$0xff]
    %vm217 = vcmask 916480
    %v219 = vsel %vm217, %v215, 0
    %v222 = vsel %vm217, %v216, 0
    %224 = vmatpush.msra.mxu0 0.0
    %225 = vmatpush.msra.mxu0 0.0
    %226 = vmatpush.msra.mxu0 %v214
    %227 = vmatpush.msra.mxu0 %v213
    %228 = vmatpush.msra.mxu0 %v212
    %229 = vmatpush.msra.mxu0 %v211
    %230 = vmatpush.msra.mxu0 %v210
    %231 = vmatpush.msra.mxu0 %v209
    %232 = vmatpush.msra.mxu0 %v208
    %233 = vmatpush.msra.mxu0 %v207
    %234 = vmatpush.msra.mxu0 %v206
    %235 = vmatpush.msra.mxu0 %v205
    %236 = vmatpush.msra.mxu0 %v204
    %237 = vmatpush.msra.mxu0 %v203
    %238 = vmatpush.msra.mxu0 %v202
    %239 = vmatpush.msra.mxu0 %v201
    %240 = vmatmul.f32.gmra.mxu0 %v219
    %v241 = vpop.f32.mrf.mxu0
    %v242 = vadd.f32 0.0, %v241
    %243 = vmatmul.f32.gmra.mxu0 %v222
    %v244 = vpop.f32.mrf.mxu0
    %v245 = vadd.f32 0.0, %v244
    %246 = vdwg.mxu0
    %v247 = vld [vmem:[%s2 + $0xa9] sm:$0xff]
    %v248 = vld [vmem:[%s2 + $0xb1] sm:$0xff]
    %v249 = vld [vmem:[%s2 + $0xb9] sm:$0x1]
    %v250 = vperm.slane %v249, 0
    %vm251 = vcmask 130048
    %v253 = vsel %vm251, %v242, 0
    %v256 = vsel %vm251, %v245, 0
    %258 = vmatpush.msra.mxu0 0.0
    %259 = vmatpush.msra.mxu0 0.0
    %260 = vmatpush.msra.mxu0 0.0
    %261 = vmatpush.msra.mxu0 0.0
    %262 = vmatpush.msra.mxu0 0.0
    %263 = vmatpush.msra.mxu0 0.0
    %264 = vmatpush.msra.mxu0 0.0
    %265 = vmatpush.msra.mxu0 0.0
    %266 = vmatpush.msra.mxu0 0.0
    %267 = vmatpush.msra.mxu0 0.0
    %268 = vmatpush.msra.mxu0 0.0
    %269 = vmatpush.msra.mxu0 0.0
    %270 = vmatpush.msra.mxu0 0.0
    %271 = vmatpush.msra.mxu0 0.0
    %272 = vmatpush.msra.mxu0 %v248
    %273 = vmatpush.msra.mxu0 %v247
    %274 = vmatmul.f32.gmra.mxu0 %v253
    %v275 = vpop.f32.mrf.mxu0
    %v276 = vadd.f32 %v250, %v275
    %277 = vmatmul.f32.gmra.mxu0 %v256
    %v278 = vpop.f32.mrf.mxu0
    %v279 = vadd.f32 %v250, %v278
    %280 = vdwg.mxu0
    %v281 = vld [vmem:[%s2 + $0x50] sm:$0xff]
    %v282 = vld [vmem:[%s2 + $0x58] sm:$0xff]
    %v283 = vadd.f32 %v276, %v281
    %v284 = vadd.f32 %v279, %v282
    %v285 = vld [vmem:[%s2 + $0x10] sm:$0xff]
    %v286 = vld [vmem:[%s2 + $0x18] sm:$0xff]
    %v287 = vld [vmem:[%s2 + $0x20] sm:$0xff]
    %v288 = vld [vmem:[%s2 + $0x28] sm:$0xff]
    %v289 = vld [vmem:[%s2 + $0x30] sm:$0xff]
    %v290 = vld [vmem:[%s2 + $0x38] sm:$0xff]
    %v291 = vld [vmem:[%s2 + $0x40] sm:$0xff]
    %v292 = vld [vmem:[%s2 + $0x48] sm:$0xff]
    %v293 = vld [vmem:[%s2 + $0xba] sm:$0x1]
    %v294 = vld [vmem:[%s2 + $0xbb] sm:$0x1]
    %vm295 = vcmask 261120
    %v296 = vsel %vm295, %v283, 0.0
    %297 = vadd.xlane.f32.xlu0 %v296
    %v298 = vpop.xlane.xlu0 %297
    %v299 = vsel %vm295, %v284, 0.0
    %300 = vadd.xlane.f32.xlu0 %v299
    %v301 = vpop.xlane.xlu0 %300
    %v302 = vrcp.pop 32.0
    %v303 = vmul.f32 32.0, %v302
    %v304 = vsub.f32 1.0, %v303
    %v305 = vmul.f32 %v302, %v304
    %v306 = vadd.f32 %v302, %v305
    %vm307 = vweird.f32 %v302
    %v308 = vsel %vm307, %v302, %v306
    %v309 = vmul.f32 %v298, %v308
    %v310 = vmul.f32 %v301, %v308
    %v311 = vsub.f32 %v283, %v309
    %v312 = vsub.f32 %v284, %v310
    %v313 = vmul.f32 %v311, %v311
    %v314 = vmul.f32 %v312, %v312
    %v315 = vsel %vm295, %v313, 0.0
    %316 = vadd.xlane.f32.xlu0 %v315
    %v317 = vpop.xlane.xlu0 %316
    %v318 = vsel %vm295, %v314, 0.0
    %319 = vadd.xlane.f32.xlu0 %v318
    %v320 = vpop.xlane.xlu0 %319
    %v321 = vmul.f32 %v317, %v308
    %v322 = vmul.f32 %v320, %v308
    %v323 = vadd.f32 %v321, 1e-05
    %v324 = vadd.f32 %v322, 1e-05
    %v325 = vrsqrt.pop %v323
    %v326 = vmul.f32 %v325, %v323
    %v327 = vmul.f32 %v326, %v325
    %v328 = vmul.f32 0.5, %v327
    %v329 = vsub.f32 1.5, %v328
    %v330 = vmul.f32 %v325, %v329
    %vm331 = vweird.f32 %v323
    %vm332 = vweird.f32 %v325
    %vm333 = vmor %vm331, %vm332
    %v334 = vsel %vm333, %v325, %v330
    %v335 = vrsqrt.pop %v324
    %v336 = vmul.f32 %v335, %v324
    %v337 = vmul.f32 %v336, %v335
    %v338 = vmul.f32 0.5, %v337
    %v339 = vsub.f32 1.5, %v338
    %v340 = vmul.f32 %v335, %v339
    %vm341 = vweird.f32 %v324
    %vm342 = vweird.f32 %v335
    %vm343 = vmor %vm341, %vm342
    %v344 = vsel %vm343, %v335, %v340
    %v345 = vmul.f32 %v311, %v334
    %v346 = vmul.f32 %v312, %v344
    %v347 = vperm.slane %v293, 0
    %v348 = vmul.f32 %v345, %v347
    %v349 = vmul.f32 %v346, %v347
    %v350 = vperm.slane %v294, 0
    %v351 = vadd.f32 %v348, %v350
    %v352 = vadd.f32 %v349, %v350
    %v353 = vld [vmem:[%s2 + $0xbc] sm:$0xff]
    %v354 = vld [vmem:[%s2 + $0xc4] sm:$0xff]
    %v355 = vld [vmem:[%s2 + $0xcc] sm:$0xff]
    %v356 = vld [vmem:[%s2 + $0xd4] sm:$0xff]
    %v357 = vld [vmem:[%s2 + $0xdc] sm:$0x1]
    %v358 = vperm.slane %v357, 0
    %v360 = vsel %vm295, %v351, 0
    %v363 = vsel %vm295, %v352, 0
    %365 = vmatpush.msra.mxu0 0.0
    %366 = vmatpush.msra.mxu0 0.0
    %367 = vmatpush.msra.mxu0 0.0
    %368 = vmatpush.msra.mxu0 0.0
    %369 = vmatpush.msra.mxu0 0.0
    %370 = vmatpush.msra.mxu0 0.0
    %371 = vmatpush.msra.mxu0 0.0
    %372 = vmatpush.msra.mxu0 0.0
    %373 = vmatpush.msra.mxu0 0.0
    %374 = vmatpush.msra.mxu0 0.0
    %375 = vmatpush.msra.mxu0 0.0
    %376 = vmatpush.msra.mxu0 0.0
    %377 = vmatpush.msra.mxu0 %v356
    %378 = vmatpush.msra.mxu0 %v355
    %379 = vmatpush.msra.mxu0 %v354
    %380 = vmatpush.msra.mxu0 %v353
    %381 = vmatmul.f32.gmra.mxu0 %v360
    %v382 = vpop.f32.mrf.mxu0
    %v383 = vadd.f32 %v358, %v382
    %384 = vmatmul.f32.gmra.mxu0 %v363
    %v385 = vpop.f32.mrf.mxu0
    %v386 = vadd.f32 %v358, %v385
    %387 = vdwg.mxu0
    %390 = vrot.lane.b32.xlu0 %v383, 120
    %v391 = vpop.permute.xlu0 %390
    %392 = vrot.lane.b32.xlu0 %v386, 120
    %v393 = vpop.permute.xlu0 %392
    %394 = vrot.lane.b32.xlu0 %v383, 112
    %v395 = vpop.permute.xlu0 %394
    %396 = vrot.lane.b32.xlu0 %v386, 112
    %v397 = vpop.permute.xlu0 %396
    %398 = vrot.lane.b32.xlu0 %v383, 104
    %v399 = vpop.permute.xlu0 %398
    %400 = vrot.lane.b32.xlu0 %v386, 104
    %v401 = vpop.permute.xlu0 %400
    %402 = vrot.lane.b32.xlu0 %v383, 96
    %v403 = vpop.permute.xlu0 %402
    %404 = vrot.lane.b32.xlu0 %v386, 96
    %v405 = vpop.permute.xlu0 %404
    %406 = vrot.lane.b32.xlu0 %v391, 96
    %v407 = vpop.permute.xlu0 %406
    %408 = vrot.lane.b32.xlu0 %v393, 96
    %v409 = vpop.permute.xlu0 %408
    %410 = vrot.lane.b32.xlu0 %v395, 96
    %v411 = vpop.permute.xlu0 %410
    %412 = vrot.lane.b32.xlu0 %v397, 96
    %v413 = vpop.permute.xlu0 %412
    %414 = vrot.lane.b32.xlu0 %v399, 96
    %v415 = vpop.permute.xlu0 %414
    %416 = vrot.lane.b32.xlu0 %v401, 96
    %v417 = vpop.permute.xlu0 %416
    %vm418 = vcmask 64512
    %v419 = vsel %vm418, %v383, 0
    %v421 = vsel %vm418, %v386, 0
    %v423 = vsel %vm418, %v391, 0
    %v425 = vsel %vm418, %v393, 0
    %v427 = vsel %vm418, %v395, 0
    %v429 = vsel %vm418, %v397, 0
    %v431 = vsel %vm418, %v399, 0
    %v433 = vsel %vm418, %v401, 0
    %v435 = vsel %vm418, %v403, 0
    %v437 = vsel %vm418, %v405, 0
    %v439 = vsel %vm418, %v407, 0
    %v441 = vsel %vm418, %v409, 0
    %v443 = vsel %vm418, %v411, 0
    %v445 = vsel %vm418, %v413, 0
    %v447 = vsel %vm418, %v415, 0
    %v449 = vsel %vm418, %v417, 0
    %451 = vmatpush.xpose.msra.mxu0 0.0
    %452 = vmatpush.xpose.msra.mxu0 0.0
    %453 = vmatpush.xpose.msra.mxu0 0.0
    %454 = vmatpush.xpose.msra.mxu0 0.0
    %455 = vmatpush.xpose.msra.mxu0 0.0
    %456 = vmatpush.xpose.msra.mxu0 0.0
    %457 = vmatpush.xpose.msra.mxu0 0.0
    %458 = vmatpush.xpose.msra.mxu0 0.0
    %459 = vmatpush.xpose.msra.mxu0 %v449
    %460 = vmatpush.xpose.msra.mxu0 %v447
    %461 = vmatpush.xpose.msra.mxu0 %v445
    %462 = vmatpush.xpose.msra.mxu0 %v443
    %463 = vmatpush.xpose.msra.mxu0 %v441
    %464 = vmatpush.xpose.msra.mxu0 %v439
    %465 = vmatpush.xpose.msra.mxu0 %v437
    %466 = vmatpush.xpose.msra.mxu0 %v435
    %467 = vmatmul.f32.gmra.mxu0 %v419
    %v468 = vpop.f32.mrf.mxu0
    %v469 = vadd.f32 0.0, %v468
    %470 = vmatmul.f32.gmra.mxu0 %v421
    %v471 = vpop.f32.mrf.mxu0
    %v472 = vadd.f32 0.0, %v471
    %473 = vmatmul.f32.gmra.mxu0 %v423
    %v474 = vpop.f32.mrf.mxu0
    %v475 = vadd.f32 0.0, %v474
    %476 = vmatmul.f32.gmra.mxu0 %v425
    %v477 = vpop.f32.mrf.mxu0
    %v478 = vadd.f32 0.0, %v477
    %479 = vmatmul.f32.gmra.mxu0 %v427
    %v480 = vpop.f32.mrf.mxu0
    %v481 = vadd.f32 0.0, %v480
    %482 = vmatmul.f32.gmra.mxu0 %v429
    %v483 = vpop.f32.mrf.mxu0
    %v484 = vadd.f32 0.0, %v483
    %485 = vmatmul.f32.gmra.mxu0 %v431
    %v486 = vpop.f32.mrf.mxu0
    %v487 = vadd.f32 0.0, %v486
    %488 = vmatmul.f32.gmra.mxu0 %v433
    %v489 = vpop.f32.mrf.mxu0
    %v490 = vadd.f32 0.0, %v489
    %491 = vdwg.mxu0
    %v492 = vmul.f32 %v469, 0.35355338
    %v493 = vmul.f32 %v472, 0.35355338
    %v494 = vmul.f32 %v475, 0.35355338
    %v495 = vmul.f32 %v478, 0.35355338
    %v496 = vmul.f32 %v481, 0.35355338
    %v497 = vmul.f32 %v484, 0.35355338
    %v498 = vmul.f32 %v487, 0.35355338
    %v499 = vmul.f32 %v490, 0.35355338
    %v500 = vadd.f32 %v492, %v285
    %v501 = vadd.f32 %v493, %v286
    %v502 = vadd.f32 %v494, %v287
    %v503 = vadd.f32 %v495, %v288
    %v504 = vadd.f32 %v496, %v289
    %v505 = vadd.f32 %v497, %v290
    %v506 = vadd.f32 %v498, %v291
    %v507 = vadd.f32 %v499, %v292
    %vm508 = vcmask 523264
    %v509 = vsel %vm508, %v500, -inf
    %510 = vmax.xlane.f32.xlu0 %v509
    %v511 = vpop.xlane.xlu0 %510
    %v512 = vsel %vm508, %v501, -inf
    %513 = vmax.xlane.f32.xlu0 %v512
    %v514 = vpop.xlane.xlu0 %513
    %v515 = vsel %vm508, %v502, -inf
    %516 = vmax.xlane.f32.xlu0 %v515
    %v517 = vpop.xlane.xlu0 %516
    %v518 = vsel %vm508, %v503, -inf
    %519 = vmax.xlane.f32.xlu0 %v518
    %v520 = vpop.xlane.xlu0 %519
    %v521 = vsel %vm508, %v504, -inf
    %522 = vmax.xlane.f32.xlu0 %v521
    %v523 = vpop.xlane.xlu0 %522
    %v524 = vsel %vm508, %v505, -inf
    %525 = vmax.xlane.f32.xlu0 %v524
    %v526 = vpop.xlane.xlu0 %525
    %v527 = vsel %vm508, %v506, -inf
    %528 = vmax.xlane.f32.xlu0 %v527
    %v529 = vpop.xlane.xlu0 %528
    %v530 = vsel %vm508, %v507, -inf
    %531 = vmax.xlane.f32.xlu0 %v530
    %v532 = vpop.xlane.xlu0 %531
    %v533 = vsub.f32 %v500, %v511
    %v534 = vsub.f32 %v501, %v514
    %v535 = vsub.f32 %v502, %v517
    %v536 = vsub.f32 %v503, %v520
    %v537 = vsub.f32 %v504, %v523
    %v538 = vsub.f32 %v505, %v526
    %v539 = vsub.f32 %v506, %v529
    %v540 = vsub.f32 %v507, %v532
    %v541 = vmul.f32 %v533, 1.442695
    %v542 = vpow.pop %v541
    %v543 = vmul.f32 %v534, 1.442695
    %v544 = vpow.pop %v543
    %v545 = vmul.f32 %v535, 1.442695
    %v546 = vpow.pop %v545
    %v547 = vmul.f32 %v536, 1.442695
    %v548 = vpow.pop %v547
    %v549 = vmul.f32 %v537, 1.442695
    %v550 = vpow.pop %v549
    %v551 = vmul.f32 %v538, 1.442695
    %v552 = vpow.pop %v551
    %v553 = vmul.f32 %v539, 1.442695
    %v554 = vpow.pop %v553
    %v555 = vmul.f32 %v540, 1.442695
    %v556 = vpow.pop %v555
    %v557 = vsel %vm508, %v542, 0.0
    %558 = vadd.xlane.f32.xlu0 %v557
    %v559 = vpop.xlane.xlu0 %558
    %v560 = vsel %vm508, %v544, 0.0
    %561 = vadd.xlane.f32.xlu0 %v560
    %v562 = vpop.xlane.xlu0 %561
    %v563 = vsel %vm508, %v546, 0.0
    %564 = vadd.xlane.f32.xlu0 %v563
    %v565 = vpop.xlane.xlu0 %564
    %v566 = vsel %vm508, %v548, 0.0
    %567 = vadd.xlane.f32.xlu0 %v566
    %v568 = vpop.xlane.xlu0 %567
    %v569 = vsel %vm508, %v550, 0.0
    %570 = vadd.xlane.f32.xlu0 %v569
    %v571 = vpop.xlane.xlu0 %570
    %v572 = vsel %vm508, %v552, 0.0
    %573 = vadd.xlane.f32.xlu0 %v572
    %v574 = vpop.xlane.xlu0 %573
    %v575 = vsel %vm508, %v554, 0.0
    %576 = vadd.xlane.f32.xlu0 %v575
    %v577 = vpop.xlane.xlu0 %576
    %v578 = vsel %vm508, %v556, 0.0
    %579 = vadd.xlane.f32.xlu0 %v578
    %v580 = vpop.xlane.xlu0 %579
    %v581 = vrcp.pop %v559
    %v582 = vrcp.pop %v562
    %v583 = vrcp.pop %v565
    %v584 = vrcp.pop %v568
    %v585 = vrcp.pop %v571
    %v586 = vrcp.pop %v574
    %v587 = vrcp.pop %v577
    %v588 = vrcp.pop %v580
    %v589 = vmul.f32 %v542, %v581
    %v590 = vmul.f32 %v544, %v582
    %v591 = vmul.f32 %v546, %v583
    %v592 = vmul.f32 %v548, %v584
    %v593 = vmul.f32 %v550, %v585
    %v594 = vmul.f32 %v552, %v586
    %v595 = vmul.f32 %v554, %v587
    %v596 = vmul.f32 %v556, %v588
    %597 = vrot.lane.b32.xlu0 %v383, 64
    %v598 = vpop.permute.xlu0 %597
    %599 = vrot.lane.b32.xlu0 %v386, 64
    %v600 = vpop.permute.xlu0 %599
    %601 = vrot.lane.b32.xlu0 %v391, 64
    %v602 = vpop.permute.xlu0 %601
    %603 = vrot.lane.b32.xlu0 %v393, 64
    %v604 = vpop.permute.xlu0 %603
    %605 = vrot.lane.b32.xlu0 %v395, 64
    %v606 = vpop.permute.xlu0 %605
    %607 = vrot.lane.b32.xlu0 %v397, 64
    %v608 = vpop.permute.xlu0 %607
    %609 = vrot.lane.b32.xlu0 %v399, 64
    %v610 = vpop.permute.xlu0 %609
    %611 = vrot.lane.b32.xlu0 %v401, 64
    %v612 = vpop.permute.xlu0 %611
    %v622 = vsel %vm508, %v589, 0
    %v625 = vsel %vm508, %v590, 0
    %v628 = vsel %vm508, %v591, 0
    %v631 = vsel %vm508, %v592, 0
    %v634 = vsel %vm508, %v593, 0
    %v637 = vsel %vm508, %v594, 0
    %v640 = vsel %vm508, %v595, 0
    %v643 = vsel %vm508, %v596, 0
    %645 = vmatpush.msra.mxu0 0.0
    %646 = vmatpush.msra.mxu0 0.0
    %647 = vmatpush.msra.mxu0 0.0
    %648 = vmatpush.msra.mxu0 0.0
    %649 = vmatpush.msra.mxu0 0.0
    %650 = vmatpush.msra.mxu0 0.0
    %651 = vmatpush.msra.mxu0 0.0
    %652 = vmatpush.msra.mxu0 0.0
    %653 = vmatpush.msra.mxu0 %v612
    %654 = vmatpush.msra.mxu0 %v610
    %655 = vmatpush.msra.mxu0 %v608
    %656 = vmatpush.msra.mxu0 %v606
    %657 = vmatpush.msra.mxu0 %v604
    %658 = vmatpush.msra.mxu0 %v602
    %659 = vmatpush.msra.mxu0 %v600
    %660 = vmatpush.msra.mxu0 %v598
    %661 = vmatmul.f32.gmra.mxu0 %v622
    %v662 = vpop.f32.mrf.mxu0
    %v663 = vadd.f32 0.0, %v662
    %664 = vmatmul.f32.gmra.mxu0 %v625
    %v665 = vpop.f32.mrf.mxu0
    %v666 = vadd.f32 0.0, %v665
    %667 = vmatmul.f32.gmra.mxu0 %v628
    %v668 = vpop.f32.mrf.mxu0
    %v669 = vadd.f32 0.0, %v668
    %670 = vmatmul.f32.gmra.mxu0 %v631
    %v671 = vpop.f32.mrf.mxu0
    %v672 = vadd.f32 0.0, %v671
    %673 = vmatmul.f32.gmra.mxu0 %v634
    %v674 = vpop.f32.mrf.mxu0
    %v675 = vadd.f32 0.0, %v674
    %676 = vmatmul.f32.gmra.mxu0 %v637
    %v677 = vpop.f32.mrf.mxu0
    %v678 = vadd.f32 0.0, %v677
    %679 = vmatmul.f32.gmra.mxu0 %v640
    %v680 = vpop.f32.mrf.mxu0
    %v681 = vadd.f32 0.0, %v680
    %682 = vmatmul.f32.gmra.mxu0 %v643
    %v683 = vpop.f32.mrf.mxu0
    %v684 = vadd.f32 0.0, %v683
    %685 = vdwg.mxu0
    %688 = vrot.lane.b32.xlu0 %v669, 8
    %v689 = vpop.permute.xlu0 %688
    %690 = vrot.lane.b32.xlu0 %v672, 8
    %v691 = vpop.permute.xlu0 %690
    %696 = vrot.lane.b32.xlu0 %v675, 16
    %v697 = vpop.permute.xlu0 %696
    %698 = vrot.lane.b32.xlu0 %v678, 16
    %v699 = vpop.permute.xlu0 %698
    %704 = vrot.lane.b32.xlu0 %v681, 24
    %v705 = vpop.permute.xlu0 %704
    %706 = vrot.lane.b32.xlu0 %v684, 24
    %v707 = vpop.permute.xlu0 %706
    %v710 = vsel %vm418, %v663, %v689
    %v711 = vsel %vm418, %v666, %v691
    %v712 = vsel %vm251, %v710, %v697
    %v713 = vsel %vm251, %v711, %v699
    %vm714 = vcmask 195584
    %v715 = vsel %vm714, %v712, %v705
    %v716 = vsel %vm714, %v713, %v707
    %v717 = vld [vmem:[%s2 + $0xdd] sm:$0xff]
    %v718 = vld [vmem:[%s2 + $0xe5] sm:$0xff]
    %v719 = vld [vmem:[%s2 + $0xed] sm:$0xff]
    %v720 = vld [vmem:[%s2 + $0xf5] sm:$0xff]
    %v722 = vsel %vm295, %v715, 0
    %v725 = vsel %vm295, %v716, 0
    %727 = vmatpush.msra.mxu0 0.0
    %728 = vmatpush.msra.mxu0 0.0
    %729 = vmatpush.msra.mxu0 0.0
    %730 = vmatpush.msra.mxu0 0.0
    %731 = vmatpush.msra.mxu0 0.0
    %732 = vmatpush.msra.mxu0 0.0
    %733 = vmatpush.msra.mxu0 0.0
    %734 = vmatpush.msra.mxu0 0.0
    %735 = vmatpush.msra.mxu0 0.0
    %736 = vmatpush.msra.mxu0 0.0
    %737 = vmatpush.msra.mxu0 0.0
    %738 = vmatpush.msra.mxu0 0.0
    %739 = vmatpush.msra.mxu0 %v720
    %740 = vmatpush.msra.mxu0 %v719
    %741 = vmatpush.msra.mxu0 %v718
    %742 = vmatpush.msra.mxu0 %v717
    %743 = vmatmul.f32.gmra.mxu0 %v722
    %v744 = vpop.f32.mrf.mxu0
    %v745 = vadd.f32 0.0, %v744
    %746 = vmatmul.f32.gmra.mxu0 %v725
    %v747 = vpop.f32.mrf.mxu0
    %v748 = vadd.f32 0.0, %v747
    %749 = vdwg.mxu0
    %v750 = vadd.f32 %v283, %v745
    %v751 = vadd.f32 %v284, %v748
    %v752 = vld [vmem:[%s2 + $0xfd] sm:$0x1]
    %v753 = vperm.slane %v752, 0
    %v754 = vadd.f32 %v750, %v753
    %v755 = vadd.f32 %v751, %v753
    %v756 = vld [vmem:[%s2 + $0xfe] sm:$0x1]
    %v757 = vld [vmem:[%s2 + $0xff] sm:$0x1]
    %v758 = vsel %vm295, %v754, 0.0
    %759 = vadd.xlane.f32.xlu0 %v758
    %v760 = vpop.xlane.xlu0 %759
    %v761 = vsel %vm295, %v755, 0.0
    %762 = vadd.xlane.f32.xlu0 %v761
    %v763 = vpop.xlane.xlu0 %762
    %v764 = vmul.f32 %v760, %v308
    %v765 = vmul.f32 %v763, %v308
    %v766 = vsub.f32 %v754, %v764
    %v767 = vsub.f32 %v755, %v765
    %v768 = vmul.f32 %v766, %v766
    %v769 = vmul.f32 %v767, %v767
    %v770 = vsel %vm295, %v768, 0.0
    %771 = vadd.xlane.f32.xlu0 %v770
    %v772 = vpop.xlane.xlu0 %771
    %v773 = vsel %vm295, %v769, 0.0
    %774 = vadd.xlane.f32.xlu0 %v773
    %v775 = vpop.xlane.xlu0 %774
    %v776 = vmul.f32 %v772, %v308
    %v777 = vmul.f32 %v775, %v308
    %v778 = vadd.f32 %v776, 1e-05
    %v779 = vadd.f32 %v777, 1e-05
    %v780 = vrsqrt.pop %v778
    %v781 = vmul.f32 %v780, %v778
    %v782 = vmul.f32 %v781, %v780
    %v783 = vmul.f32 0.5, %v782
    %v784 = vsub.f32 1.5, %v783
    %v785 = vmul.f32 %v780, %v784
    %vm786 = vweird.f32 %v778
    %vm787 = vweird.f32 %v780
    %vm788 = vmor %vm786, %vm787
    %v789 = vsel %vm788, %v780, %v785
    %v790 = vrsqrt.pop %v779
    %v791 = vmul.f32 %v790, %v779
    %v792 = vmul.f32 %v791, %v790
    %v793 = vmul.f32 0.5, %v792
    %v794 = vsub.f32 1.5, %v793
    %v795 = vmul.f32 %v790, %v794
    %vm796 = vweird.f32 %v779
    %vm797 = vweird.f32 %v790
    %vm798 = vmor %vm796, %vm797
    %v799 = vsel %vm798, %v790, %v795
    %v800 = vmul.f32 %v766, %v789
    %v801 = vmul.f32 %v767, %v799
    %v802 = vperm.slane %v756, 0
    %v803 = vmul.f32 %v800, %v802
    %v804 = vmul.f32 %v801, %v802
    %v805 = vperm.slane %v757, 0
    %v806 = vadd.f32 %v803, %v805
    %v807 = vadd.f32 %v804, %v805
    %v808 = vld [vmem:[%s2 + $0x100] sm:$0xff]
    %v809 = vld [vmem:[%s2 + $0x108] sm:$0xff]
    %v810 = vld [vmem:[%s2 + $0x110] sm:$0xff]
    %v811 = vld [vmem:[%s2 + $0x118] sm:$0xff]
    %v812 = vld [vmem:[%s2 + $0x120] sm:$0x1]
    %v813 = vperm.slane %v812, 0
    %v815 = vsel %vm295, %v806, 0
    %v818 = vsel %vm295, %v807, 0
    %820 = vmatpush.msra.mxu0 0.0
    %821 = vmatpush.msra.mxu0 0.0
    %822 = vmatpush.msra.mxu0 0.0
    %823 = vmatpush.msra.mxu0 0.0
    %824 = vmatpush.msra.mxu0 0.0
    %825 = vmatpush.msra.mxu0 0.0
    %826 = vmatpush.msra.mxu0 0.0
    %827 = vmatpush.msra.mxu0 0.0
    %828 = vmatpush.msra.mxu0 0.0
    %829 = vmatpush.msra.mxu0 0.0
    %830 = vmatpush.msra.mxu0 0.0
    %831 = vmatpush.msra.mxu0 0.0
    %832 = vmatpush.msra.mxu0 %v811
    %833 = vmatpush.msra.mxu0 %v810
    %834 = vmatpush.msra.mxu0 %v809
    %835 = vmatpush.msra.mxu0 %v808
    %836 = vmatmul.f32.gmra.mxu0 %v815
    %v837 = vpop.f32.mrf.mxu0
    %v838 = vadd.f32 %v813, %v837
    %839 = vmatmul.f32.gmra.mxu0 %v818
    %v840 = vpop.f32.mrf.mxu0
    %v841 = vadd.f32 %v813, %v840
    %842 = vdwg.mxu0
    %v843 = vmul.f32 %v838, %v838
    %v844 = vmul.f32 %v841, %v841
    %v845 = vmul.f32 %v838, %v843
    %v846 = vmul.f32 %v841, %v844
    %v847 = vmul.f32 %v845, 0.044715
    %v848 = vmul.f32 %v846, 0.044715
    %v849 = vadd.f32 %v838, %v847
    %v850 = vadd.f32 %v841, %v848
    %v851 = vmul.f32 %v849, 0.7978846
    %v852 = vmul.f32 %v850, 0.7978846
    %v853 = vtanh.pop %v851
    %v854 = vtanh.pop %v852
    %v855 = vadd.f32 %v853, 1.0
    %v856 = vadd.f32 %v854, 1.0
    %v857 = vmul.f32 %v855, 0.5
    %v858 = vmul.f32 %v856, 0.5
    %v859 = vmul.f32 %v838, %v857
    %v860 = vmul.f32 %v841, %v858
    %v861 = vld [vmem:[%s2 + $0x121] sm:$0xff]
    %v862 = vld [vmem:[%s2 + $0x129] sm:$0xff]
    %v863 = vld [vmem:[%s2 + $0x131] sm:$0xff]
    %v864 = vld [vmem:[%s2 + $0x139] sm:$0xff]
    %v865 = vld [vmem:[%s2 + $0x141] sm:$0xff]
    %v866 = vld [vmem:[%s2 + $0x149] sm:$0xff]
    %v867 = vld [vmem:[%s2 + $0x151] sm:$0xff]
    %v868 = vld [vmem:[%s2 + $0x159] sm:$0xff]
    %v870 = vsel %vm508, %v859, 0
    %v873 = vsel %vm508, %v860, 0
    %875 = vmatpush.msra.mxu0 0.0
    %876 = vmatpush.msra.mxu0 0.0
    %877 = vmatpush.msra.mxu0 0.0
    %878 = vmatpush.msra.mxu0 0.0
    %879 = vmatpush.msra.mxu0 0.0
    %880 = vmatpush.msra.mxu0 0.0
    %881 = vmatpush.msra.mxu0 0.0
    %882 = vmatpush.msra.mxu0 0.0
    %883 = vmatpush.msra.mxu0 %v868
    %884 = vmatpush.msra.mxu0 %v867
    %885 = vmatpush.msra.mxu0 %v866
    %886 = vmatpush.msra.mxu0 %v865
    %887 = vmatpush.msra.mxu0 %v864
    %888 = vmatpush.msra.mxu0 %v863
    %889 = vmatpush.msra.mxu0 %v862
    %890 = vmatpush.msra.mxu0 %v861
    %891 = vmatmul.f32.gmra.mxu0 %v870
    %v892 = vpop.f32.mrf.mxu0
    %v893 = vadd.f32 0.0, %v892
    %894 = vmatmul.f32.gmra.mxu0 %v873
    %v895 = vpop.f32.mrf.mxu0
    %v896 = vadd.f32 0.0, %v895
    %897 = vdwg.mxu0
    %v898 = vadd.f32 %v754, %v893
    %v899 = vadd.f32 %v755, %v896
    %v900 = vld [vmem:[%s2 + $0x161] sm:$0x1]
    %v901 = vperm.slane %v900, 0
    %v902 = vadd.f32 %v898, %v901
    %v903 = vadd.f32 %v899, %v901
    %v904 = vld [vmem:[%s2 + $0x162] sm:$0x1]
    %v905 = vld [vmem:[%s2 + $0x163] sm:$0x1]
    %v906 = vsel %vm295, %v902, 0.0
    %907 = vadd.xlane.f32.xlu0 %v906
    %v908 = vpop.xlane.xlu0 %907
    %v909 = vsel %vm295, %v903, 0.0
    %910 = vadd.xlane.f32.xlu0 %v909
    %v911 = vpop.xlane.xlu0 %910
    %v912 = vmul.f32 %v908, %v308
    %v913 = vmul.f32 %v911, %v308
    %v914 = vsub.f32 %v902, %v912
    %v915 = vsub.f32 %v903, %v913
    %v916 = vmul.f32 %v914, %v914
    %v917 = vmul.f32 %v915, %v915
    %v918 = vsel %vm295, %v916, 0.0
    %919 = vadd.xlane.f32.xlu0 %v918
    %v920 = vpop.xlane.xlu0 %919
    %v921 = vsel %vm295, %v917, 0.0
    %922 = vadd.xlane.f32.xlu0 %v921
    %v923 = vpop.xlane.xlu0 %922
    %v924 = vmul.f32 %v920, %v308
    %v925 = vmul.f32 %v923, %v308
    %v926 = vadd.f32 %v924, 1e-05
    %v927 = vadd.f32 %v925, 1e-05
    %v928 = vrsqrt.pop %v926
    %v929 = vmul.f32 %v928, %v926
    %v930 = vmul.f32 %v929, %v928
    %v931 = vmul.f32 0.5, %v930
    %v932 = vsub.f32 1.5, %v931
    %v933 = vmul.f32 %v928, %v932
    %vm934 = vweird.f32 %v926
    %vm935 = vweird.f32 %v928
    %vm936 = vmor %vm934, %vm935
    %v937 = vsel %vm936, %v928, %v933
    %v938 = vrsqrt.pop %v927
    %v939 = vmul.f32 %v938, %v927
    %v940 = vmul.f32 %v939, %v938
    %v941 = vmul.f32 0.5, %v940
    %v942 = vsub.f32 1.5, %v941
    %v943 = vmul.f32 %v938, %v942
    %vm944 = vweird.f32 %v927
    %vm945 = vweird.f32 %v938
    %vm946 = vmor %vm944, %vm945
    %v947 = vsel %vm946, %v938, %v943
    %v948 = vmul.f32 %v914, %v937
    %v949 = vmul.f32 %v915, %v947
    %v950 = vperm.slane %v904, 0
    %v951 = vmul.f32 %v948, %v950
    %v952 = vmul.f32 %v949, %v950
    %v953 = vperm.slane %v905, 0
    %v954 = vadd.f32 %v951, %v953
    %v955 = vadd.f32 %v952, %v953
    %v956 = vld [vmem:[%s2 + $0x164] sm:$0xff]
    %v957 = vld [vmem:[%s2 + $0x16c] sm:$0xff]
    %v958 = vld [vmem:[%s2 + $0x174] sm:$0xff]
    %v959 = vld [vmem:[%s2 + $0x17c] sm:$0xff]
    %v960 = vld [vmem:[%s2 + $0x184] sm:$0x1]
    %v961 = vperm.slane %v960, 0
    %v963 = vsel %vm295, %v954, 0
    %v966 = vsel %vm295, %v955, 0
    %968 = vmatpush.msra.mxu0 0.0
    %969 = vmatpush.msra.mxu0 0.0
    %970 = vmatpush.msra.mxu0 0.0
    %971 = vmatpush.msra.mxu0 0.0
    %972 = vmatpush.msra.mxu0 0.0
    %973 = vmatpush.msra.mxu0 0.0
    %974 = vmatpush.msra.mxu0 0.0
    %975 = vmatpush.msra.mxu0 0.0
    %976 = vmatpush.msra.mxu0 0.0
    %977 = vmatpush.msra.mxu0 0.0
    %978 = vmatpush.msra.mxu0 0.0
    %979 = vmatpush.msra.mxu0 0.0
    %980 = vmatpush.msra.mxu0 %v959
    %981 = vmatpush.msra.mxu0 %v958
    %982 = vmatpush.msra.mxu0 %v957
    %983 = vmatpush.msra.mxu0 %v956
    %984 = vmatmul.f32.gmra.mxu0 %v963
    %v985 = vpop.f32.mrf.mxu0
    %v986 = vadd.f32 %v961, %v985
    %987 = vmatmul.f32.gmra.mxu0 %v966
    %v988 = vpop.f32.mrf.mxu0
    %v989 = vadd.f32 %v961, %v988
    %990 = vdwg.mxu0
    %993 = vrot.lane.b32.xlu0 %v986, 120
    %v994 = vpop.permute.xlu0 %993
    %995 = vrot.lane.b32.xlu0 %v989, 120
    %v996 = vpop.permute.xlu0 %995
    %997 = vrot.lane.b32.xlu0 %v986, 112
    %v998 = vpop.permute.xlu0 %997
    %999 = vrot.lane.b32.xlu0 %v989, 112
    %v1000 = vpop.permute.xlu0 %999
    %1001 = vrot.lane.b32.xlu0 %v986, 104
    %v1002 = vpop.permute.xlu0 %1001
    %1003 = vrot.lane.b32.xlu0 %v989, 104
    %v1004 = vpop.permute.xlu0 %1003
    %1005 = vrot.lane.b32.xlu0 %v986, 96
    %v1006 = vpop.permute.xlu0 %1005
    %1007 = vrot.lane.b32.xlu0 %v989, 96
    %v1008 = vpop.permute.xlu0 %1007
    %1009 = vrot.lane.b32.xlu0 %v994, 96
    %v1010 = vpop.permute.xlu0 %1009
    %1011 = vrot.lane.b32.xlu0 %v996, 96
    %v1012 = vpop.permute.xlu0 %1011
    %1013 = vrot.lane.b32.xlu0 %v998, 96
    %v1014 = vpop.permute.xlu0 %1013
    %1015 = vrot.lane.b32.xlu0 %v1000, 96
    %v1016 = vpop.permute.xlu0 %1015
    %1017 = vrot.lane.b32.xlu0 %v1002, 96
    %v1018 = vpop.permute.xlu0 %1017
    %1019 = vrot.lane.b32.xlu0 %v1004, 96
    %v1020 = vpop.permute.xlu0 %1019
    %v1021 = vsel %vm418, %v986, 0
    %v1023 = vsel %vm418, %v989, 0
    %v1025 = vsel %vm418, %v994, 0
    %v1027 = vsel %vm418, %v996, 0
    %v1029 = vsel %vm418, %v998, 0
    %v1031 = vsel %vm418, %v1000, 0
    %v1033 = vsel %vm418, %v1002, 0
    %v1035 = vsel %vm418, %v1004, 0
    %v1037 = vsel %vm418, %v1006, 0
    %v1039 = vsel %vm418, %v1008, 0
    %v1041 = vsel %vm418, %v1010, 0
    %v1043 = vsel %vm418, %v1012, 0
    %v1045 = vsel %vm418, %v1014, 0
    %v1047 = vsel %vm418, %v1016, 0
    %v1049 = vsel %vm418, %v1018, 0
    %v1051 = vsel %vm418, %v1020, 0
    %1053 = vmatpush.xpose.msra.mxu0 0.0
    %1054 = vmatpush.xpose.msra.mxu0 0.0
    %1055 = vmatpush.xpose.msra.mxu0 0.0
    %1056 = vmatpush.xpose.msra.mxu0 0.0
    %1057 = vmatpush.xpose.msra.mxu0 0.0
    %1058 = vmatpush.xpose.msra.mxu0 0.0
    %1059 = vmatpush.xpose.msra.mxu0 0.0
    %1060 = vmatpush.xpose.msra.mxu0 0.0
    %1061 = vmatpush.xpose.msra.mxu0 %v1051
    %1062 = vmatpush.xpose.msra.mxu0 %v1049
    %1063 = vmatpush.xpose.msra.mxu0 %v1047
    %1064 = vmatpush.xpose.msra.mxu0 %v1045
    %1065 = vmatpush.xpose.msra.mxu0 %v1043
    %1066 = vmatpush.xpose.msra.mxu0 %v1041
    %1067 = vmatpush.xpose.msra.mxu0 %v1039
    %1068 = vmatpush.xpose.msra.mxu0 %v1037
    %1069 = vmatmul.f32.gmra.mxu0 %v1021
    %v1070 = vpop.f32.mrf.mxu0
    %v1071 = vadd.f32 0.0, %v1070
    %1072 = vmatmul.f32.gmra.mxu0 %v1023
    %v1073 = vpop.f32.mrf.mxu0
    %v1074 = vadd.f32 0.0, %v1073
    %1075 = vmatmul.f32.gmra.mxu0 %v1025
    %v1076 = vpop.f32.mrf.mxu0
    %v1077 = vadd.f32 0.0, %v1076
    %1078 = vmatmul.f32.gmra.mxu0 %v1027
    %v1079 = vpop.f32.mrf.mxu0
    %v1080 = vadd.f32 0.0, %v1079
    %1081 = vmatmul.f32.gmra.mxu0 %v1029
    %v1082 = vpop.f32.mrf.mxu0
    %v1083 = vadd.f32 0.0, %v1082
    %1084 = vmatmul.f32.gmra.mxu0 %v1031
    %v1085 = vpop.f32.mrf.mxu0
    %v1086 = vadd.f32 0.0, %v1085
    %1087 = vmatmul.f32.gmra.mxu0 %v1033
    %v1088 = vpop.f32.mrf.mxu0
    %v1089 = vadd.f32 0.0, %v1088
    %1090 = vmatmul.f32.gmra.mxu0 %v1035
    %v1091 = vpop.f32.mrf.mxu0
    %v1092 = vadd.f32 0.0, %v1091
    %1093 = vdwg.mxu0
    %v1094 = vmul.f32 %v1071, 0.35355338
    %v1095 = vmul.f32 %v1074, 0.35355338
    %v1096 = vmul.f32 %v1077, 0.35355338
    %v1097 = vmul.f32 %v1080, 0.35355338
    %v1098 = vmul.f32 %v1083, 0.35355338
    %v1099 = vmul.f32 %v1086, 0.35355338
    %v1100 = vmul.f32 %v1089, 0.35355338
    %v1101 = vmul.f32 %v1092, 0.35355338
    %v1102 = vadd.f32 %v1094, %v285
    %v1103 = vadd.f32 %v1095, %v286
    %v1104 = vadd.f32 %v1096, %v287
    %v1105 = vadd.f32 %v1097, %v288
    %v1106 = vadd.f32 %v1098, %v289
    %v1107 = vadd.f32 %v1099, %v290
    %v1108 = vadd.f32 %v1100, %v291
    %v1109 = vadd.f32 %v1101, %v292
    %v1110 = vsel %vm508, %v1102, -inf
    %1111 = vmax.xlane.f32.xlu0 %v1110
    %v1112 = vpop.xlane.xlu0 %1111
    %v1113 = vsel %vm508, %v1103, -inf
    %1114 = vmax.xlane.f32.xlu0 %v1113
    %v1115 = vpop.xlane.xlu0 %1114
    %v1116 = vsel %vm508, %v1104, -inf
    %1117 = vmax.xlane.f32.xlu0 %v1116
    %v1118 = vpop.xlane.xlu0 %1117
    %v1119 = vsel %vm508, %v1105, -inf
    %1120 = vmax.xlane.f32.xlu0 %v1119
    %v1121 = vpop.xlane.xlu0 %1120
    %v1122 = vsel %vm508, %v1106, -inf
    %1123 = vmax.xlane.f32.xlu0 %v1122
    %v1124 = vpop.xlane.xlu0 %1123
    %v1125 = vsel %vm508, %v1107, -inf
    %1126 = vmax.xlane.f32.xlu0 %v1125
    %v1127 = vpop.xlane.xlu0 %1126
    %v1128 = vsel %vm508, %v1108, -inf
    %1129 = vmax.xlane.f32.xlu0 %v1128
    %v1130 = vpop.xlane.xlu0 %1129
    %v1131 = vsel %vm508, %v1109, -inf
    %1132 = vmax.xlane.f32.xlu0 %v1131
    %v1133 = vpop.xlane.xlu0 %1132
    %v1134 = vsub.f32 %v1102, %v1112
    %v1135 = vsub.f32 %v1103, %v1115
    %v1136 = vsub.f32 %v1104, %v1118
    %v1137 = vsub.f32 %v1105, %v1121
    %v1138 = vsub.f32 %v1106, %v1124
    %v1139 = vsub.f32 %v1107, %v1127
    %v1140 = vsub.f32 %v1108, %v1130
    %v1141 = vsub.f32 %v1109, %v1133
    %v1142 = vmul.f32 %v1134, 1.442695
    %v1143 = vpow.pop %v1142
    %v1144 = vmul.f32 %v1135, 1.442695
    %v1145 = vpow.pop %v1144
    %v1146 = vmul.f32 %v1136, 1.442695
    %v1147 = vpow.pop %v1146
    %v1148 = vmul.f32 %v1137, 1.442695
    %v1149 = vpow.pop %v1148
    %v1150 = vmul.f32 %v1138, 1.442695
    %v1151 = vpow.pop %v1150
    %v1152 = vmul.f32 %v1139, 1.442695
    %v1153 = vpow.pop %v1152
    %v1154 = vmul.f32 %v1140, 1.442695
    %v1155 = vpow.pop %v1154
    %v1156 = vmul.f32 %v1141, 1.442695
    %v1157 = vpow.pop %v1156
    %v1158 = vsel %vm508, %v1143, 0.0
    %1159 = vadd.xlane.f32.xlu0 %v1158
    %v1160 = vpop.xlane.xlu0 %1159
    %v1161 = vsel %vm508, %v1145, 0.0
    %1162 = vadd.xlane.f32.xlu0 %v1161
    %v1163 = vpop.xlane.xlu0 %1162
    %v1164 = vsel %vm508, %v1147, 0.0
    %1165 = vadd.xlane.f32.xlu0 %v1164
    %v1166 = vpop.xlane.xlu0 %1165
    %v1167 = vsel %vm508, %v1149, 0.0
    %1168 = vadd.xlane.f32.xlu0 %v1167
    %v1169 = vpop.xlane.xlu0 %1168
    %v1170 = vsel %vm508, %v1151, 0.0
    %1171 = vadd.xlane.f32.xlu0 %v1170
    %v1172 = vpop.xlane.xlu0 %1171
    %v1173 = vsel %vm508, %v1153, 0.0
    %1174 = vadd.xlane.f32.xlu0 %v1173
    %v1175 = vpop.xlane.xlu0 %1174
    %v1176 = vsel %vm508, %v1155, 0.0
    %1177 = vadd.xlane.f32.xlu0 %v1176
    %v1178 = vpop.xlane.xlu0 %1177
    %v1179 = vsel %vm508, %v1157, 0.0
    %1180 = vadd.xlane.f32.xlu0 %v1179
    %v1181 = vpop.xlane.xlu0 %1180
    %v1182 = vrcp.pop %v1160
    %v1183 = vrcp.pop %v1163
    %v1184 = vrcp.pop %v1166
    %v1185 = vrcp.pop %v1169
    %v1186 = vrcp.pop %v1172
    %v1187 = vrcp.pop %v1175
    %v1188 = vrcp.pop %v1178
    %v1189 = vrcp.pop %v1181
    %v1190 = vmul.f32 %v1143, %v1182
    %v1191 = vmul.f32 %v1145, %v1183
    %v1192 = vmul.f32 %v1147, %v1184
    %v1193 = vmul.f32 %v1149, %v1185
    %v1194 = vmul.f32 %v1151, %v1186
    %v1195 = vmul.f32 %v1153, %v1187
    %v1196 = vmul.f32 %v1155, %v1188
    %v1197 = vmul.f32 %v1157, %v1189
    %1198 = vrot.lane.b32.xlu0 %v986, 64
    %v1199 = vpop.permute.xlu0 %1198
    %1200 = vrot.lane.b32.xlu0 %v989, 64
    %v1201 = vpop.permute.xlu0 %1200
    %1202 = vrot.lane.b32.xlu0 %v994, 64
    %v1203 = vpop.permute.xlu0 %1202
    %1204 = vrot.lane.b32.xlu0 %v996, 64
    %v1205 = vpop.permute.xlu0 %1204
    %1206 = vrot.lane.b32.xlu0 %v998, 64
    %v1207 = vpop.permute.xlu0 %1206
    %1208 = vrot.lane.b32.xlu0 %v1000, 64
    %v1209 = vpop.permute.xlu0 %1208
    %1210 = vrot.lane.b32.xlu0 %v1002, 64
    %v1211 = vpop.permute.xlu0 %1210
    %1212 = vrot.lane.b32.xlu0 %v1004, 64
    %v1213 = vpop.permute.xlu0 %1212
    %v1223 = vsel %vm508, %v1190, 0
    %v1226 = vsel %vm508, %v1191, 0
    %v1229 = vsel %vm508, %v1192, 0
    %v1232 = vsel %vm508, %v1193, 0
    %v1235 = vsel %vm508, %v1194, 0
    %v1238 = vsel %vm508, %v1195, 0
    %v1241 = vsel %vm508, %v1196, 0
    %v1244 = vsel %vm508, %v1197, 0
    %1246 = vmatpush.msra.mxu0 0.0
    %1247 = vmatpush.msra.mxu0 0.0
    %1248 = vmatpush.msra.mxu0 0.0
    %1249 = vmatpush.msra.mxu0 0.0
    %1250 = vmatpush.msra.mxu0 0.0
    %1251 = vmatpush.msra.mxu0 0.0
    %1252 = vmatpush.msra.mxu0 0.0
    %1253 = vmatpush.msra.mxu0 0.0
    %1254 = vmatpush.msra.mxu0 %v1213
    %1255 = vmatpush.msra.mxu0 %v1211
    %1256 = vmatpush.msra.mxu0 %v1209
    %1257 = vmatpush.msra.mxu0 %v1207
    %1258 = vmatpush.msra.mxu0 %v1205
    %1259 = vmatpush.msra.mxu0 %v1203
    %1260 = vmatpush.msra.mxu0 %v1201
    %1261 = vmatpush.msra.mxu0 %v1199
    %1262 = vmatmul.f32.gmra.mxu0 %v1223
    %v1263 = vpop.f32.mrf.mxu0
    %v1264 = vadd.f32 0.0, %v1263
    %1265 = vmatmul.f32.gmra.mxu0 %v1226
    %v1266 = vpop.f32.mrf.mxu0
    %v1267 = vadd.f32 0.0, %v1266
    %1268 = vmatmul.f32.gmra.mxu0 %v1229
    %v1269 = vpop.f32.mrf.mxu0
    %v1270 = vadd.f32 0.0, %v1269
    %1271 = vmatmul.f32.gmra.mxu0 %v1232
    %v1272 = vpop.f32.mrf.mxu0
    %v1273 = vadd.f32 0.0, %v1272
    %1274 = vmatmul.f32.gmra.mxu0 %v1235
    %v1275 = vpop.f32.mrf.mxu0
    %v1276 = vadd.f32 0.0, %v1275
    %1277 = vmatmul.f32.gmra.mxu0 %v1238
    %v1278 = vpop.f32.mrf.mxu0
    %v1279 = vadd.f32 0.0, %v1278
    %1280 = vmatmul.f32.gmra.mxu0 %v1241
    %v1281 = vpop.f32.mrf.mxu0
    %v1282 = vadd.f32 0.0, %v1281
    %1283 = vmatmul.f32.gmra.mxu0 %v1244
    %v1284 = vpop.f32.mrf.mxu0
    %v1285 = vadd.f32 0.0, %v1284
    %1286 = vdwg.mxu0
    %1289 = vrot.lane.b32.xlu0 %v1270, 8
    %v1290 = vpop.permute.xlu0 %1289
    %1291 = vrot.lane.b32.xlu0 %v1273, 8
    %v1292 = vpop.permute.xlu0 %1291
    %1297 = vrot.lane.b32.xlu0 %v1276, 16
    %v1298 = vpop.permute.xlu0 %1297
    %1299 = vrot.lane.b32.xlu0 %v1279, 16
    %v1300 = vpop.permute.xlu0 %1299
    %1305 = vrot.lane.b32.xlu0 %v1282, 24
    %v1306 = vpop.permute.xlu0 %1305
    %1307 = vrot.lane.b32.xlu0 %v1285, 24
    %v1308 = vpop.permute.xlu0 %1307
    %v1311 = vsel %vm418, %v1264, %v1290
    %v1312 = vsel %vm418, %v1267, %v1292
    %v1313 = vsel %vm251, %v1311, %v1298
    %v1314 = vsel %vm251, %v1312, %v1300
    %v1315 = vsel %vm714, %v1313, %v1306
    %v1316 = vsel %vm714, %v1314, %v1308
    %v1317 = vld [vmem:[%s2 + $0x185] sm:$0xff]
    %v1318 = vld [vmem:[%s2 + $0x18d] sm:$0xff]
    %v1319 = vld [vmem:[%s2 + $0x195] sm:$0xff]
    %v1320 = vld [vmem:[%s2 + $0x19d] sm:$0xff]
    %v1322 = vsel %vm295, %v1315, 0
    %v1325 = vsel %vm295, %v1316, 0
    %1327 = vmatpush.msra.mxu0 0.0
    %1328 = vmatpush.msra.mxu0 0.0
    %1329 = vmatpush.msra.mxu0 0.0
    %1330 = vmatpush.msra.mxu0 0.0
    %1331 = vmatpush.msra.mxu0 0.0
    %1332 = vmatpush.msra.mxu0 0.0
    %1333 = vmatpush.msra.mxu0 0.0
    %1334 = vmatpush.msra.mxu0 0.0
    %1335 = vmatpush.msra.mxu0 0.0
    %1336 = vmatpush.msra.mxu0 0.0
    %1337 = vmatpush.msra.mxu0 0.0
    %1338 = vmatpush.msra.mxu0 0.0
    %1339 = vmatpush.msra.mxu0 %v1320
    %1340 = vmatpush.msra.mxu0 %v1319
    %1341 = vmatpush.msra.mxu0 %v1318
    %1342 = vmatpush.msra.mxu0 %v1317
    %1343 = vmatmul.f32.gmra.mxu0 %v1322
    %v1344 = vpop.f32.mrf.mxu0
    %v1345 = vadd.f32 0.0, %v1344
    %1346 = vmatmul.f32.gmra.mxu0 %v1325
    %v1347 = vpop.f32.mrf.mxu0
    %v1348 = vadd.f32 0.0, %v1347
    %1349 = vdwg.mxu0
    %v1350 = vadd.f32 %v902, %v1345
    %v1351 = vadd.f32 %v903, %v1348
    %v1352 = vld [vmem:[%s2 + $0x1a5] sm:$0x1]
    %v1353 = vperm.slane %v1352, 0
    %v1354 = vadd.f32 %v1350, %v1353
    %v1355 = vadd.f32 %v1351, %v1353
    %v1356 = vld [vmem:[%s2 + $0x1a6] sm:$0x1]
    %v1357 = vld [vmem:[%s2 + $0x1a7] sm:$0x1]
    %v1358 = vsel %vm295, %v1354, 0.0
    %1359 = vadd.xlane.f32.xlu0 %v1358
    %v1360 = vpop.xlane.xlu0 %1359
    %v1361 = vsel %vm295, %v1355, 0.0
    %1362 = vadd.xlane.f32.xlu0 %v1361
    %v1363 = vpop.xlane.xlu0 %1362
    %v1364 = vmul.f32 %v1360, %v308
    %v1365 = vmul.f32 %v1363, %v308
    %v1366 = vsub.f32 %v1354, %v1364
    %v1367 = vsub.f32 %v1355, %v1365
    %v1368 = vmul.f32 %v1366, %v1366
    %v1369 = vmul.f32 %v1367, %v1367
    %v1370 = vsel %vm295, %v1368, 0.0
    %1371 = vadd.xlane.f32.xlu0 %v1370
    %v1372 = vpop.xlane.xlu0 %1371
    %v1373 = vsel %vm295, %v1369, 0.0
    %1374 = vadd.xlane.f32.xlu0 %v1373
    %v1375 = vpop.xlane.xlu0 %1374
    %v1376 = vmul.f32 %v1372, %v308
    %v1377 = vmul.f32 %v1375, %v308
    %v1378 = vadd.f32 %v1376, 1e-05
    %v1379 = vadd.f32 %v1377, 1e-05
    %v1380 = vrsqrt.pop %v1378
    %v1381 = vmul.f32 %v1380, %v1378
    %v1382 = vmul.f32 %v1381, %v1380
    %v1383 = vmul.f32 0.5, %v1382
    %v1384 = vsub.f32 1.5, %v1383
    %v1385 = vmul.f32 %v1380, %v1384
    %vm1386 = vweird.f32 %v1378
    %vm1387 = vweird.f32 %v1380
    %vm1388 = vmor %vm1386, %vm1387
    %v1389 = vsel %vm1388, %v1380, %v1385
    %v1390 = vrsqrt.pop %v1379
    %v1391 = vmul.f32 %v1390, %v1379
    %v1392 = vmul.f32 %v1391, %v1390
    %v1393 = vmul.f32 0.5, %v1392
    %v1394 = vsub.f32 1.5, %v1393
    %v1395 = vmul.f32 %v1390, %v1394
    %vm1396 = vweird.f32 %v1379
    %vm1397 = vweird.f32 %v1390
    %vm1398 = vmor %vm1396, %vm1397
    %v1399 = vsel %vm1398, %v1390, %v1395
    %v1400 = vmul.f32 %v1366, %v1389
    %v1401 = vmul.f32 %v1367, %v1399
    %v1402 = vperm.slane %v1356, 0
    %v1403 = vmul.f32 %v1400, %v1402
    %v1404 = vmul.f32 %v1401, %v1402
    %v1405 = vperm.slane %v1357, 0
    %v1406 = vadd.f32 %v1403, %v1405
    %v1407 = vadd.f32 %v1404, %v1405
    %v1408 = vld [vmem:[%s2 + $0x1a8] sm:$0xff]
    %v1409 = vld [vmem:[%s2 + $0x1b0] sm:$0xff]
    %v1410 = vld [vmem:[%s2 + $0x1b8] sm:$0xff]
    %v1411 = vld [vmem:[%s2 + $0x1c0] sm:$0xff]
    %v1412 = vld [vmem:[%s2 + $0x1c8] sm:$0x1]
    %v1413 = vperm.slane %v1412, 0
    %v1415 = vsel %vm295, %v1406, 0
    %v1418 = vsel %vm295, %v1407, 0
    %1420 = vmatpush.msra.mxu0 0.0
    %1421 = vmatpush.msra.mxu0 0.0
    %1422 = vmatpush.msra.mxu0 0.0
    %1423 = vmatpush.msra.mxu0 0.0
    %1424 = vmatpush.msra.mxu0 0.0
    %1425 = vmatpush.msra.mxu0 0.0
    %1426 = vmatpush.msra.mxu0 0.0
    %1427 = vmatpush.msra.mxu0 0.0
    %1428 = vmatpush.msra.mxu0 0.0
    %1429 = vmatpush.msra.mxu0 0.0
    %1430 = vmatpush.msra.mxu0 0.0
    %1431 = vmatpush.msra.mxu0 0.0
    %1432 = vmatpush.msra.mxu0 %v1411
    %1433 = vmatpush.msra.mxu0 %v1410
    %1434 = vmatpush.msra.mxu0 %v1409
    %1435 = vmatpush.msra.mxu0 %v1408
    %1436 = vmatmul.f32.gmra.mxu0 %v1415
    %v1437 = vpop.f32.mrf.mxu0
    %v1438 = vadd.f32 %v1413, %v1437
    %1439 = vmatmul.f32.gmra.mxu0 %v1418
    %v1440 = vpop.f32.mrf.mxu0
    %v1441 = vadd.f32 %v1413, %v1440
    %1442 = vdwg.mxu0
    %v1443 = vmul.f32 %v1438, %v1438
    %v1444 = vmul.f32 %v1441, %v1441
    %v1445 = vmul.f32 %v1438, %v1443
    %v1446 = vmul.f32 %v1441, %v1444
    %v1447 = vmul.f32 %v1445, 0.044715
    %v1448 = vmul.f32 %v1446, 0.044715
    %v1449 = vadd.f32 %v1438, %v1447
    %v1450 = vadd.f32 %v1441, %v1448
    %v1451 = vmul.f32 %v1449, 0.7978846
    %v1452 = vmul.f32 %v1450, 0.7978846
    %v1453 = vtanh.pop %v1451
    %v1454 = vtanh.pop %v1452
    %v1455 = vadd.f32 %v1453, 1.0
    %v1456 = vadd.f32 %v1454, 1.0
    %v1457 = vmul.f32 %v1455, 0.5
    %v1458 = vmul.f32 %v1456, 0.5
    %v1459 = vmul.f32 %v1438, %v1457
    %v1460 = vmul.f32 %v1441, %v1458
    %v1461 = vld [vmem:[%s2 + $0x1c9] sm:$0xff]
    %v1462 = vld [vmem:[%s2 + $0x1d1] sm:$0xff]
    %v1463 = vld [vmem:[%s2 + $0x1d9] sm:$0xff]
    %v1464 = vld [vmem:[%s2 + $0x1e1] sm:$0xff]
    %v1465 = vld [vmem:[%s2 + $0x1e9] sm:$0xff]
    %v1466 = vld [vmem:[%s2 + $0x1f1] sm:$0xff]
    %v1467 = vld [vmem:[%s2 + $0x1f9] sm:$0xff]
    %v1468 = vld [vmem:[%s2 + $0x201] sm:$0xff]
    %v1470 = vsel %vm508, %v1459, 0
    %v1473 = vsel %vm508, %v1460, 0
    %1475 = vmatpush.msra.mxu0 0.0
    %1476 = vmatpush.msra.mxu0 0.0
    %1477 = vmatpush.msra.mxu0 0.0
    %1478 = vmatpush.msra.mxu0 0.0
    %1479 = vmatpush.msra.mxu0 0.0
    %1480 = vmatpush.msra.mxu0 0.0
    %1481 = vmatpush.msra.mxu0 0.0
    %1482 = vmatpush.msra.mxu0 0.0
    %1483 = vmatpush.msra.mxu0 %v1468
    %1484 = vmatpush.msra.mxu0 %v1467
    %1485 = vmatpush.msra.mxu0 %v1466
    %1486 = vmatpush.msra.mxu0 %v1465
    %1487 = vmatpush.msra.mxu0 %v1464
    %1488 = vmatpush.msra.mxu0 %v1463
    %1489 = vmatpush.msra.mxu0 %v1462
    %1490 = vmatpush.msra.mxu0 %v1461
    %1491 = vmatmul.f32.gmra.mxu0 %v1470
    %v1492 = vpop.f32.mrf.mxu0
    %v1493 = vadd.f32 0.0, %v1492
    %1494 = vmatmul.f32.gmra.mxu0 %v1473
    %v1495 = vpop.f32.mrf.mxu0
    %v1496 = vadd.f32 0.0, %v1495
    %1497 = vdwg.mxu0
    %v1498 = vadd.f32 %v1354, %v1493
    %v1499 = vadd.f32 %v1355, %v1496
    %v1500 = vld [vmem:[%s2 + $0x209] sm:$0x1]
    %v1501 = vperm.slane %v1500, 0
    %v1502 = vadd.f32 %v1498, %v1501
    %v1503 = vadd.f32 %v1499, %v1501
    %v1505 = vrot.slane %v1502, 2
    %1506 = vrot.lane.b32.xlu0 %v1505, 32
    %v1507 = vpop.permute.xlu0 %1506
    %v1509 = vrot.slane %v1502, 4
    %1510 = vrot.lane.b32.xlu0 %v1509, 64
    %v1511 = vpop.permute.xlu0 %1510
    %v1513 = vrot.slane %v1502, 6
    %1514 = vrot.lane.b32.xlu0 %v1513, 96
    %v1515 = vpop.permute.xlu0 %1514
    %v1518 = vrot.slane %v1503, 2
    %1519 = vrot.lane.b32.xlu0 %v1518, 32
    %v1520 = vpop.permute.xlu0 %1519
    %v1522 = vrot.slane %v1503, 4
    %1523 = vrot.lane.b32.xlu0 %v1522, 64
    %v1524 = vpop.permute.xlu0 %1523
    %v1526 = vrot.slane %v1503, 6
    %1527 = vrot.lane.b32.xlu0 %v1526, 96
    %v1528 = vpop.permute.xlu0 %1527
    %v1530 = vsel %vm295, %v1502, %v1507
    %v1531 = vsel %vm508, %v1530, %v1511
    %vm1532 = vcmask 785408
    %v1533 = vsel %vm1532, %v1531, %v1515
    %v1534 = vsel %vm295, %v1503, %v1520
    %v1535 = vsel %vm508, %v1534, %v1524
    %v1536 = vsel %vm1532, %v1535, %v1528
    %v1537 = vld [vmem:[%s2 + $0x20a] sm:$0xff]
    %v1538 = vld [vmem:[%s2 + $0x212] sm:$0xff]
    %v1539 = vld [vmem:[%s2 + $0x21a] sm:$0xff]
    %v1540 = vld [vmem:[%s2 + $0x222] sm:$0xff]
    %v1541 = vld [vmem:[%s2 + $0x22a] sm:$0xff]
    %v1542 = vld [vmem:[%s2 + $0x232] sm:$0xff]
    %v1543 = vld [vmem:[%s2 + $0x23a] sm:$0xff]
    %v1544 = vld [vmem:[%s2 + $0x242] sm:$0xff]
    %v1545 = vld [vmem:[%s2 + $0x24a] sm:$0xff]
    %v1546 = vld [vmem:[%s2 + $0x252] sm:$0xff]
    %v1547 = vld [vmem:[%s2 + $0x25a] sm:$0xff]
    %v1548 = vld [vmem:[%s2 + $0x262] sm:$0xff]
    %v1549 = vld [vmem:[%s2 + $0x26a] sm:$0xff]
    %v1550 = vld [vmem:[%s2 + $0x272] sm:$0xff]
    %v1551 = vld [vmem:[%s2 + $0x27a] sm:$0xff]
    %v1552 = vld [vmem:[%s2 + $0x282] sm:$0xff]
    %v1553 = vld [vmem:[%s2 + $0x28a] sm:$0xff]
    %v1554 = vld [vmem:[%s2 + $0x292] sm:$0xff]
    %v1555 = vld [vmem:[%s2 + $0x29a] sm:$0xff]
    %v1556 = vld [vmem:[%s2 + $0x2a2] sm:$0xff]
    %v1557 = vld [vmem:[%s2 + $0x2aa] sm:$0xff]
    %v1558 = vld [vmem:[%s2 + $0x2b2] sm:$0xff]
    %v1559 = vld [vmem:[%s2 + $0x2ba] sm:$0xff]
    %v1560 = vld [vmem:[%s2 + $0x2c2] sm:$0xff]
    %v1561 = vld [vmem:[%s2 + $0x2ca] sm:$0xff]
    %v1562 = vld [vmem:[%s2 + $0x2d2] sm:$0xff]
    %v1563 = vld [vmem:[%s2 + $0x2da] sm:$0xff]
    %v1564 = vld [vmem:[%s2 + $0x2e2] sm:$0xff]
    %v1565 = vld [vmem:[%s2 + $0x2ea] sm:$0xff]
    %v1566 = vld [vmem:[%s2 + $0x2f2] sm:$0xff]
    %v1567 = vld [vmem:[%s2 + $0x2fa] sm:$0xff]
    %v1568 = vld [vmem:[%s2 + $0x302] sm:$0xff]
    %v1569 = vld [vmem:[%s2 + $0x30a] sm:$0x1]
    %v1570 = vperm.slane %v1569, 0
    %1571 = vmatpush.msra.mxu0 %v1552
    %1572 = vmatpush.msra.mxu0 %v1551
    %1573 = vmatpush.msra.mxu0 %v1550
    %1574 = vmatpush.msra.mxu0 %v1549
    %1575 = vmatpush.msra.mxu0 %v1548
    %1576 = vmatpush.msra.mxu0 %v1547
    %1577 = vmatpush.msra.mxu0 %v1546
    %1578 = vmatpush.msra.mxu0 %v1545
    %1579 = vmatpush.msra.mxu0 %v1544
    %1580 = vmatpush.msra.mxu0 %v1543
    %1581 = vmatpush.msra.mxu0 %v1542
    %1582 = vmatpush.msra.mxu0 %v1541
    %1583 = vmatpush.msra.mxu0 %v1540
    %1584 = vmatpush.msra.mxu0 %v1539
    %1585 = vmatpush.msra.mxu0 %v1538
    %1586 = vmatpush.msra.mxu0 %v1537
    %1587 = vmatmul.f32.gmra.mxu0 %v1533
    %v1588 = vpop.f32.mrf.mxu0
    %v1589 = vadd.f32 %v1570, %v1588
    %1590 = vdwg.mxu0
    %1591 = vmatpush.msra.mxu0 %v1568
    %1592 = vmatpush.msra.mxu0 %v1567
    %1593 = vmatpush.msra.mxu0 %v1566
    %1594 = vmatpush.msra.mxu0 %v1565
    %1595 = vmatpush.msra.mxu0 %v1564
    %1596 = vmatpush.msra.mxu0 %v1563
    %1597 = vmatpush.msra.mxu0 %v1562
    %1598 = vmatpush.msra.mxu0 %v1561
    %1599 = vmatpush.msra.mxu0 %v1560
    %1600 = vmatpush.msra.mxu0 %v1559
    %1601 = vmatpush.msra.mxu0 %v1558
    %1602 = vmatpush.msra.mxu0 %v1557
    %1603 = vmatpush.msra.mxu0 %v1556
    %1604 = vmatpush.msra.mxu0 %v1555
    %1605 = vmatpush.msra.mxu0 %v1554
    %1606 = vmatpush.msra.mxu0 %v1553
    %1607 = vmatmul.f32.gmra.mxu0 %v1536
    %v1608 = vpop.f32.mrf.mxu0
    %v1609 = vadd.f32 %v1589, %v1608
    %1610 = vdwg.mxu0
    %vm1611 = vcmp.gt.f32.partialorder %v1609, 0.0
    %v1612 = vmul.f32 %v1609, 1.442695
    %v1613 = vpow.pop %v1612
    %v1614 = vsub.f32 %v1613, 1.0
    %v1615 = vsel %vm1611, %v1609, %v1614
    %v1616 = vld [vmem:[%s2 + $0x30b] sm:$0xff]
    %v1617 = vld [vmem:[%s2 + $0x313] sm:$0xff]
    %v1618 = vld [vmem:[%s2 + $0x31b] sm:$0xff]
    %v1619 = vld [vmem:[%s2 + $0x323] sm:$0xff]
    %v1620 = vld [vmem:[%s2 + $0x32b] sm:$0xff]
    %v1621 = vld [vmem:[%s2 + $0x333] sm:$0xff]
    %v1622 = vld [vmem:[%s2 + $0x33b] sm:$0xff]
    %v1623 = vld [vmem:[%s2 + $0x343] sm:$0xff]
    %v1624 = vld [vmem:[%s2 + $0x34b] sm:$0x1]
    %v1625 = vperm.slane %v1624, 0
    %v1627 = vsel %vm508, %v1615, 0
    %1629 = vmatpush.msra.mxu0 0.0
    %1630 = vmatpush.msra.mxu0 0.0
    %1631 = vmatpush.msra.mxu0 0.0
    %1632 = vmatpush.msra.mxu0 0.0
    %1633 = vmatpush.msra.mxu0 0.0
    %1634 = vmatpush.msra.mxu0 0.0
    %1635 = vmatpush.msra.mxu0 0.0
    %1636 = vmatpush.msra.mxu0 0.0
    %1637 = vmatpush.msra.mxu0 %v1623
    %1638 = vmatpush.msra.mxu0 %v1622
    %1639 = vmatpush.msra.mxu0 %v1621
    %1640 = vmatpush.msra.mxu0 %v1620
    %1641 = vmatpush.msra.mxu0 %v1619
    %1642 = vmatpush.msra.mxu0 %v1618
    %1643 = vmatpush.msra.mxu0 %v1617
    %1644 = vmatpush.msra.mxu0 %v1616
    %1645 = vmatmul.f32.gmra.mxu0 %v1627
    %v1646 = vpop.f32.mrf.mxu0
    %v1647 = vadd.f32 %v1625, %v1646
    %1648 = vdwg.mxu0
    %vm1649 = vcmask 25600
    %1650 = vst.msk [vmem:[#allocation2] sm:$0x3] %vm1649, %v1647
    %v1651 = vsel %vm1649, %v1647, -inf
    %1652 = vmax.xlane.f32.xlu0 %v1651
    %v1653 = vpop.xlane.xlu0 %1652
    %v1654 = vsub.f32 %v1647, %v1653
    %v1655 = vmul.f32 %v1654, 1.442695
    %v1656 = vpow.pop %v1655
    %v1657 = vsel %vm1649, %v1656, 0.0
    %1658 = vadd.xlane.f32.xlu0 %v1657
    %v1659 = vpop.xlane.xlu0 %1658
    %v1660 = vlog2.pop %v1659
    %v1661 = vmul.f32 %v1660, 0.6931472
    %v1662 = vsub.f32 %v1654, %v1661
    %v1663 = vld [vmem:[%s1] sm:$0x3]
    %v1664 = vmul.f32 %v1663, %v1662
    %v1665 = vsel %vm1649, %v1664, 0.0
    %1666 = vadd.xlane.f32.xlu0 %v1665
    %v1667 = vpop.xlane.xlu0 %1666
    %v1668 = vsub.f32 0.0, %v1667
    %vm1669 = vcmask 1041408
    %v1670 = vsel %vm1669, %v1668, 0.0
    %v1671 = vrot.slane %v1670, 4
    %v1672 = vadd.f32 %v1670, %v1671
    %v1673 = vrot.slane %v1672, 2
    %v1674 = vadd.f32 %v1672, %v1673
    %v1675 = vrot.slane %v1674, 1
    %v1676 = vadd.f32 %v1674, %v1675
    %v1677 = vmul.f32 %v1676, 0.5
    %vm1678 = vcmask 0
    %1679 = vst.msk [vmem:[#allocation4] sm:$0x1] %vm1678, %v1677
    // Predicated region
    $region14: #{dewave_forward.1} parent=1 // pred_check
      _
    $region15: #{dewave_forward.1} parent=1 // pred_check_branch
      %1681 = sbr.rel (0) target = $region17
    $region16: #{dewave_forward.1} parent=1 // pred_region
      %1683 = vsyncadd [#allocation3], 0
      %s1685 = sshll.u32 [#allocation2], 4
      %s1686 = int_to_ptr.vmem [resolvable:$true] %s1685
      %s1687 = sshll.u32 %s3, 4
      %s1688 = int_to_ptr.hbm [resolvable:$true] %s1687
      %1690 = dma.vmem_to_hbm [thread:$0]  %s1686, 32, %s1688, [#allocation3]
    $region17: #{dewave_forward.1} parent=1 // pred_fallthru
      _
    // Predicated region
    $region18: #{dewave_forward.1} parent=1 // pred_check
      _
    $region19: #{dewave_forward.1} parent=1 // pred_check_branch
      %1692 = sbr.rel (0) target = $region21
    $region20: #{dewave_forward.1} parent=1 // pred_region
      %1694 = vsyncadd [#allocation5], 0
      %s1696 = sshll.u32 [#allocation4], 4
      %s1697 = int_to_ptr.vmem [resolvable:$true] %s1696
      %s1698 = sshll.u32 %s4, 4
      %s1699 = int_to_ptr.hbm [resolvable:$true] %s1698
      %1701 = dma.vmem_to_hbm [thread:$0]  %s1697, 16, %s1699, [#allocation5]
    $region21: #{dewave_forward.1} parent=1 // pred_fallthru
      _
    // Predicated region
    $region22: #{dewave_forward.1} parent=1 // pred_check
      _
    $region23: #{dewave_forward.1} parent=1 // pred_check_branch
      %1703 = sbr.rel (0) target = $region25
    $region24: #{dewave_forward.1} parent=1 // pred_region
      %1705 = dma.done [#allocation3], 32
    $region25: #{dewave_forward.1} parent=1 // pred_fallthru
      _
    // Predicated region
    $region26: #{dewave_forward.1} parent=1 // pred_check
      _
    $region27: #{dewave_forward.1} parent=1 // pred_check_branch
      %1707 = sbr.rel (0) target = $region29
    $region28: #{dewave_forward.1} parent=1 // pred_region
      %1709 = dma.done [#allocation5], 16
    $region29: #{dewave_forward.1} parent=1 // pred_fallthru
      _
    %1710 = vsyncpa [#allocation3], 1
    %1711 = vsyncpa [#allocation5], 1

</llo_original>
